<compile_context>
chip_gen: v5e
topology: v5e:2x2
jax: 0.10.0
libtpu: 0.0.40
codegen_flags: <defaults>
</compile_context>

<pallas_src>
import jax
import jax.numpy as jnp
from jax.experimental import pallas as pl
from jax.experimental.pallas import tpu as pltpu

BN_EPS = 1e-5


# -------------------- wrapper-side constant builders -------------------------

def _conv_toeplitz_stacked(w_hwio, W2, N, dtype):
    """(3,3,Ci,Co) conv weights -> one K-stacked block-Toeplitz matrix of shape
    (3*N*W2*Ci, N*W2*Co).  Row block dy multiplies the activation shifted by
    dy-1 image rows; the tri-diagonal (in w2) block structure carries the
    x-direction taps and the implicit x zero padding; kron(I_N, .) makes it
    block-diagonal over the images packed along lanes."""
    Ci, Co = w_hwio.shape[2], w_hwio.shape[3]
    xin = jnp.arange(W2)[:, None]           # input column
    xo = jnp.arange(W2)[None, :]            # output column
    dx = xin - xo + 1                       # kernel x-tap index
    valid = ((dx >= 0) & (dx <= 2)).astype(w_hwio.dtype)[..., None, None]
    dxc = jnp.clip(dx, 0, 2)
    eye_n = jnp.eye(N, dtype=w_hwio.dtype)
    mats = []
    for dy in range(3):
        blk = w_hwio[dy][dxc] * valid                            # (W2, W2, Ci, Co)
        t = blk.transpose(0, 2, 1, 3).reshape(W2 * Ci, W2 * Co)  # (W2*Ci, W2*Co)
        mats.append(jnp.kron(eye_n, t))                          # (N*W2*Ci, N*W2*Co)
    # TODO(synk): for large W2*C this Toeplitz duplication grows quadratically;
    # a scaled-up / v7x variant should keep 9*Ci*Co weights and shift along W
    # in-kernel instead of materializing the Toeplitz blocks.
    return jnp.concatenate(mats, axis=0).astype(dtype)           # (3*N*W2*Ci, N*W2*Co)


def _param_stack(b, g, be, al, reps):
    """Stack the four per-channel vectors (conv bias, BN gamma, BN beta, PReLU
    alpha), each tiled to the (n, w2, c) lane layout, into one (4, reps*C)
    array -> a single DMA instead of four."""
    rows = [jnp.tile(v.astype(jnp.float32), reps) for v in (b, g, be, al)]
    return jnp.stack(rows, axis=0)


# -------------------- the fused Pallas kernel --------------------------------

def _make_down_block_kernel(N, H2, W2, c_mid, c_out):
    inv_cnt = 1.0 / float(N * H2 * W2)      # BN reduction size per channel

    def fold_per_channel(u, c):
        """u: (rows, G*c) with lanes ordered (group, channel).  Returns (1, G*c)
        per-channel totals over rows and groups, already tiled across every
        group (circular lane-roll doubling tree; rotate direction irrelevant
        for a full cyclic sum).  Requires G to be a power of two."""
        width = u.shape[1]
        k = c
        while k < width:
            u = u + pltpu.roll(u, k, axis=1)
            k *= 2
        return jnp.sum(u, axis=0, keepdims=True)

    def kernel(x_ref, t1_ref, p1_ref, t2_ref, p2_ref, o_ref):
        # ---- MaxPool2d(2,2): lanes of a row are ordered (hv, wp, n, w2, c),
        # so both maxima are pure VPU ops on lane halves (no MXU involvement).
        xa = x_ref[...]                                  # (H2, 4*N*W2*Cin)
        half = xa.shape[1] // 2
        v = jnp.maximum(xa[:, :half], xa[:, half:])      # vertical 2-max
        q = half // 2
        pooled = jnp.maximum(v[:, :q], v[:, q:])         # horizontal 2-max -> (H2, N*W2*Cin)

        def conv_bn_prelu(a, t_ref, p_ref, c):
            # 3x3 conv (pad=1) as ONE K-stacked matmul:
            #   [a(r-1) | a(r) | a(r+1)] @ [T0; T1; T2]
            # Row shift = sublane shift + zero row (y zero padding); x taps and
            # x zero padding live in the block-Toeplitz weights.
            zrow = jnp.zeros_like(a[0:1])
            a_dn = jnp.concatenate([zrow, a[:-1]], axis=0)   # a[r-1], 0 at image top
            a_up = jnp.concatenate([a[1:], zrow], axis=0)    # a[r+1], 0 at image bottom
            a_cat = jnp.concatenate([a_dn, a, a_up], axis=1)
            w = t_ref[...].astype(jnp.float32)               # bf16 weights, f32 accumulate
            p = p_ref[...]                                   # (4, G*c): bias/gamma/beta/alpha
            y = jnp.dot(a_cat, w, preferred_element_type=jnp.float32) + p[0:1]
            # BatchNorm (training-mode batch stats, two-pass) fused with PReLU.
            mean_t = fold_per_channel(y, c) * inv_cnt
            d = y - mean_t
            var_t = fold_per_channel(d * d, c) * inv_cnt
            z = d * (p[1:2] * jax.lax.rsqrt(var_t + BN_EPS)) + p[2:3]
            return jnp.where(z >= 0, z, p[3:4] * z)

        h1 = conv_bn_prelu(pooled, t1_ref, p1_ref, c_mid)
        o_ref[...] = conv_bn_prelu(h1, t2_ref, p2_ref, c_out)

    return kernel


# -------------------- wrapper -------------------------------------------------

def down_block_forward(x_nchw, params):
    f32 = jnp.float32
    x = jnp.transpose(x_nchw, (0, 2, 3, 1)).astype(f32)      # NCHW -> NHWC
    N, H, W, Cin = x.shape
    assert H % 2 == 0 and W % 2 == 0
    H2, W2 = H // 2, W // 2
    Cmid = params["w1"].shape[-1]
    Cout = params["w2"].shape[-1]
    G = N * W2
    # TODO(synk): the lane-roll fold assumes N*W2 is a power of two; other sizes
    # need a different (reshape-based) channel reduction.
    assert G & (G - 1) == 0

    # Kernel layout: rows = h2, lanes ordered (hv, wp, n, w2, c).  Images are
    # packed along lanes so hidden activations / output are lane-dense.
    xk = x.reshape(N, H2, 2, W2, 2, Cin).transpose(1, 2, 4, 0, 3, 5)
    xk = xk.reshape(H2, 4 * N * W2 * Cin)

    t1 = _conv_toeplitz_stacked(params["w1"].astype(f32), W2, N, jnp.bfloat16)
    t2 = _conv_toeplitz_stacked(params["w2"].astype(f32), W2, N, jnp.bfloat16)
    p1 = _param_stack(params["b1"], params["g1"], params["be1"], params["a1"], G)
    p2 = _param_stack(params["b2"], params["g2"], params["be2"], params["a2"], G)

    # Whole-problem-in-VMEM fused kernel (single invocation, no grid).
    # TODO(synk): shapes too large for VMEM (esp. v7x's 64 MiB) need a gridded
    # variant (row-block tiling with a 1-row halo, dimension_semantics=
    # ("parallel",) for the second TensorCore, explicit vmem_limit_bytes).
    out2d = pl.pallas_call(
        _make_down_block_kernel(N, H2, W2, Cmid, Cout),
        out_shape=jax.ShapeDtypeStruct((H2, N * W2 * Cout), f32),
        in_specs=[pl.BlockSpec(memory_space=pltpu.MemorySpace.VMEM)] * 5,
        out_specs=pl.BlockSpec(memory_space=pltpu.MemorySpace.VMEM),
    )(xk, t1, p1, t2, p2)

    # (H2, N*W2*Cout) with lanes (n, w2, c) -> NCHW
    return out2d.reshape(H2, N, W2, Cout).transpose(1, 3, 0, 2)


# -------------------- pure-JAX reference --------------------------------------

def reference_forward(x_nchw, params):
    x = jnp.transpose(x_nchw, (0, 2, 3, 1))
    p = jnp.maximum(jnp.maximum(x[:, 0::2, 0::2, :], x[:, 0::2, 1::2, :]),
                    jnp.maximum(x[:, 1::2, 0::2, :], x[:, 1::2, 1::2, :]))

    def block(h, w, b, g, be, al):
        y = jax.lax.conv_general_dilated(
            h, w, window_strides=(1, 1), padding=((1, 1), (1, 1)),
            dimension_numbers=("NHWC", "HWIO", "NHWC"),
            precision=jax.lax.Precision.HIGHEST) + b
        mean = jnp.mean(y, axis=(0, 1, 2))
        var = jnp.mean((y - mean) ** 2, axis=(0, 1, 2))
        z = (y - mean) / jnp.sqrt(var + BN_EPS) * g + be
        return jnp.where(z >= 0, z, al * z)

    h1 = block(p, params["w1"], params["b1"], params["g1"], params["be1"], params["a1"])
    h2 = block(h1, params["w2"], params["b2"], params["g2"], params["be2"], params["a2"])
    return jnp.transpose(h2, (0, 3, 1, 2))


# -------------------- params & main -------------------------------------------

def init_params(key, in_ch, out_ch):
    mid_ch = out_ch
    ks = jax.random.split(key, 10)
    f32 = jnp.float32
    return {
        "w1": 0.1 * jax.random.normal(ks[0], (3, 3, in_ch, mid_ch), f32),   # HWIO
        "b1": 0.1 * jax.random.normal(ks[1], (mid_ch,), f32),
        "g1": 1.0 + 0.1 * jax.random.normal(ks[2], (mid_ch,), f32),
        "be1": 0.1 * jax.random.normal(ks[3], (mid_ch,), f32),
        "a1": 0.25 * jnp.ones((mid_ch,), f32),                              # PReLU init
        "w2": 0.1 * jax.random.normal(ks[4], (3, 3, mid_ch, out_ch), f32),
        "b2": 0.1 * jax.random.normal(ks[5], (out_ch,), f32),
        "g2": 1.0 + 0.1 * jax.random.normal(ks[6], (out_ch,), f32),
        "be2": 0.1 * jax.random.normal(ks[7], (out_ch,), f32),
        "a2": 0.25 * jnp.ones((out_ch,), f32),
    }
    # TODO(synk): BatchNorm running_mean/var buffer updates (training-time
    # module state) are not modeled; the forward output uses batch statistics
    # exactly as PyTorch training-mode forward does.


if __name__ == "__main__":
    key = jax.random.PRNGKey(0)
    k_x, k_p = jax.random.split(key)

    N, in_ch, H, W = 2, 4, 16, 16
    out_ch = 8
    x = jax.random.normal(k_x, (N, in_ch, H, W), jnp.float32)   # PyTorch NCHW layout
    params = init_params(k_p, in_ch, out_ch)

    fwd = jax.jit(down_block_forward)
    out = jax.block_until_ready(fwd(x, params))

    assert out.shape == (N, out_ch, H // 2, W // 2), out.shape
    ref = reference_forward(x, params)
    err = float(jnp.max(jnp.abs(out - ref)))
    assert jnp.allclose(out, ref, atol=2e-2, rtol=2e-2), err

    print("KERNEL_OK")
</pallas_src>

<mosaic_0001>
module attributes {stable_mosaic.version = 11 : i64} {
  func.func @kernel(%arg0: memref<8x256xf32, #tpu.memory_space<vmem>>, %arg1: memref<192x128xbf16, #tpu.memory_space<vmem>>, %arg2: memref<4x128xf32, #tpu.memory_space<vmem>>, %arg3: memref<384x128xbf16, #tpu.memory_space<vmem>>, %arg4: memref<4x128xf32, #tpu.memory_space<vmem>>, %arg5: memref<8x128xf32, #tpu.memory_space<vmem>>) attributes {dimension_semantics = [], scalar_prefetch = 0 : i64, scratch_operands = 0 : i64, tpu.core_type = #tpu.core_type<tc>} {
    %c0 = arith.constant 0 : index
    %c0_0 = arith.constant 0 : index
    %0 = vector.load %arg0[%c0, %c0_0] : memref<8x256xf32, #tpu.memory_space<vmem>>, vector<8x256xf32>
    %1 = vector.extract_strided_slice %0 {offsets = [0, 0], sizes = [8, 128], strides = [1, 1]} : vector<8x256xf32> to vector<8x128xf32>
    %2 = vector.extract_strided_slice %0 {offsets = [0, 128], sizes = [8, 128], strides = [1, 1]} : vector<8x256xf32> to vector<8x128xf32>
    %3 = arith.maximumf %1, %2 : vector<8x128xf32>
    %4 = vector.extract_strided_slice %3 {offsets = [0, 0], sizes = [8, 64], strides = [1, 1]} : vector<8x128xf32> to vector<8x64xf32>
    %5 = vector.extract_strided_slice %3 {offsets = [0, 64], sizes = [8, 64], strides = [1, 1]} : vector<8x128xf32> to vector<8x64xf32>
    %6 = arith.maximumf %4, %5 : vector<8x64xf32>
    %cst = arith.constant 0.000000e+00 : f32
    %7 = vector.broadcast %cst : f32 to vector<1x64xf32>
    %8 = vector.extract_strided_slice %6 {offsets = [0, 0], sizes = [7, 64], strides = [1, 1]} : vector<8x64xf32> to vector<7x64xf32>
    %9 = tpu.concatenate %7, %8 in 0 : vector<1x64xf32>, vector<7x64xf32> -> vector<8x64xf32>
    %10 = vector.extract_strided_slice %6 {offsets = [1, 0], sizes = [7, 64], strides = [1, 1]} : vector<8x64xf32> to vector<7x64xf32>
    %11 = tpu.concatenate %10, %7 in 0 : vector<7x64xf32>, vector<1x64xf32> -> vector<8x64xf32>
    %12 = tpu.concatenate %9, %6, %11 in 1 : vector<8x64xf32>, vector<8x64xf32>, vector<8x64xf32> -> vector<8x192xf32>
    %c0_1 = arith.constant 0 : index
    %c0_2 = arith.constant 0 : index
    %13 = vector.load %arg1[%c0_1, %c0_2] : memref<192x128xbf16, #tpu.memory_space<vmem>>, vector<192x128xbf16>
    %14 = arith.extf %13 : vector<192x128xbf16> to vector<192x128xf32>
    %c0_3 = arith.constant 0 : index
    %c0_4 = arith.constant 0 : index
    %15 = vector.load %arg2[%c0_3, %c0_4] : memref<4x128xf32, #tpu.memory_space<vmem>>, vector<4x128xf32>
    %cst_5 = arith.constant dense<0.000000e+00> : vector<8x128xf32>
    %16 = tpu.matmul %12, %14, %cst_5 {dimension_numbers = #tpu.dot_dimension_numbers<[1], [0], [0], [1], [0, 0, 1, 1], [], []>} : vector<8x192xf32>, vector<192x128xf32>, vector<8x128xf32> -> vector<8x128xf32>
    %17 = vector.extract_strided_slice %15 {offsets = [0, 0], sizes = [1, 128], strides = [1, 1]} : vector<4x128xf32> to vector<1x128xf32>
    %18 = vector.broadcast %17 : vector<1x128xf32> to vector<8x128xf32>
    %19 = arith.addf %16, %18 : vector<8x128xf32>
    %c8_i32 = arith.constant 8 : i32
    %20 = tpu.dynamic_rotate %19 by %c8_i32 dim 1 : vector<8x128xf32>, i32 -> vector<8x128xf32>
    %21 = arith.addf %19, %20 : vector<8x128xf32>
    %c16_i32 = arith.constant 16 : i32
    %22 = tpu.dynamic_rotate %21 by %c16_i32 dim 1 : vector<8x128xf32>, i32 -> vector<8x128xf32>
    %23 = arith.addf %21, %22 : vector<8x128xf32>
    %c32_i32 = arith.constant 32 : i32
    %24 = tpu.dynamic_rotate %23 by %c32_i32 dim 1 : vector<8x128xf32>, i32 -> vector<8x128xf32>
    %25 = arith.addf %23, %24 : vector<8x128xf32>
    %c64_i32 = arith.constant 64 : i32
    %26 = tpu.dynamic_rotate %25 by %c64_i32 dim 1 : vector<8x128xf32>, i32 -> vector<8x128xf32>
    %27 = arith.addf %25, %26 : vector<8x128xf32>
    %cst_6 = arith.constant dense<0.000000e+00> : vector<128xf32>
    %28 = vector.multi_reduction <add>, %27, %cst_6 [0] : vector<8x128xf32> to vector<128xf32>
    %29 = vector.shape_cast %28 : vector<128xf32> to vector<1x128xf32>
    %cst_7 = arith.constant 7.812500e-03 : f32
    %30 = vector.broadcast %cst_7 : f32 to vector<1x128xf32>
    %31 = arith.mulf %29, %30 : vector<1x128xf32>
    %32 = vector.broadcast %31 : vector<1x128xf32> to vector<8x128xf32>
    %33 = arith.subf %19, %32 : vector<8x128xf32>
    %34 = arith.mulf %33, %33 : vector<8x128xf32>
    %c8_i32_8 = arith.constant 8 : i32
    %35 = tpu.dynamic_rotate %34 by %c8_i32_8 dim 1 : vector<8x128xf32>, i32 -> vector<8x128xf32>
    %36 = arith.addf %34, %35 : vector<8x128xf32>
    %c16_i32_9 = arith.constant 16 : i32
    %37 = tpu.dynamic_rotate %36 by %c16_i32_9 dim 1 : vector<8x128xf32>, i32 -> vector<8x128xf32>
    %38 = arith.addf %36, %37 : vector<8x128xf32>
    %c32_i32_10 = arith.constant 32 : i32
    %39 = tpu.dynamic_rotate %38 by %c32_i32_10 dim 1 : vector<8x128xf32>, i32 -> vector<8x128xf32>
    %40 = arith.addf %38, %39 : vector<8x128xf32>
    %c64_i32_11 = arith.constant 64 : i32
    %41 = tpu.dynamic_rotate %40 by %c64_i32_11 dim 1 : vector<8x128xf32>, i32 -> vector<8x128xf32>
    %42 = arith.addf %40, %41 : vector<8x128xf32>
    %cst_12 = arith.constant dense<0.000000e+00> : vector<128xf32>
    %43 = vector.multi_reduction <add>, %42, %cst_12 [0] : vector<8x128xf32> to vector<128xf32>
    %44 = vector.shape_cast %43 : vector<128xf32> to vector<1x128xf32>
    %cst_13 = arith.constant 7.812500e-03 : f32
    %45 = vector.broadcast %cst_13 : f32 to vector<1x128xf32>
    %46 = arith.mulf %44, %45 : vector<1x128xf32>
    %47 = vector.extract_strided_slice %15 {offsets = [1, 0], sizes = [1, 128], strides = [1, 1]} : vector<4x128xf32> to vector<1x128xf32>
    %cst_14 = arith.constant 9.99999974E-6 : f32
    %48 = vector.broadcast %cst_14 : f32 to vector<1x128xf32>
    %49 = arith.addf %46, %48 : vector<1x128xf32>
    %50 = math.rsqrt %49 : vector<1x128xf32>
    %51 = arith.mulf %47, %50 : vector<1x128xf32>
    %52 = vector.broadcast %51 : vector<1x128xf32> to vector<8x128xf32>
    %53 = arith.mulf %33, %52 : vector<8x128xf32>
    %54 = vector.extract_strided_slice %15 {offsets = [2, 0], sizes = [1, 128], strides = [1, 1]} : vector<4x128xf32> to vector<1x128xf32>
    %55 = vector.broadcast %54 : vector<1x128xf32> to vector<8x128xf32>
    %56 = arith.addf %53, %55 : vector<8x128xf32>
    %cst_15 = arith.constant 0.000000e+00 : f32
    %57 = vector.broadcast %cst_15 : f32 to vector<8x128xf32>
    %58 = arith.cmpf oge, %56, %57 : vector<8x128xf32>
    %59 = vector.extract_strided_slice %15 {offsets = [3, 0], sizes = [1, 128], strides = [1, 1]} : vector<4x128xf32> to vector<1x128xf32>
    %60 = vector.broadcast %59 : vector<1x128xf32> to vector<8x128xf32>
    %61 = arith.mulf %60, %56 : vector<8x128xf32>
    %62 = arith.select %58, %56, %61 : vector<8x128xi1>, vector<8x128xf32>
    %cst_16 = arith.constant 0.000000e+00 : f32
    %63 = vector.broadcast %cst_16 : f32 to vector<1x128xf32>
    %64 = vector.extract_strided_slice %62 {offsets = [0, 0], sizes = [7, 128], strides = [1, 1]} : vector<8x128xf32> to vector<7x128xf32>
    %65 = tpu.concatenate %63, %64 in 0 : vector<1x128xf32>, vector<7x128xf32> -> vector<8x128xf32>
    %66 = vector.extract_strided_slice %62 {offsets = [1, 0], sizes = [7, 128], strides = [1, 1]} : vector<8x128xf32> to vector<7x128xf32>
    %67 = tpu.concatenate %66, %63 in 0 : vector<7x128xf32>, vector<1x128xf32> -> vector<8x128xf32>
    %68 = tpu.concatenate %65, %62, %67 in 1 : vector<8x128xf32>, vector<8x128xf32>, vector<8x128xf32> -> vector<8x384xf32>
    %c0_17 = arith.constant 0 : index
    %c0_18 = arith.constant 0 : index
    %69 = vector.load %arg3[%c0_17, %c0_18] : memref<384x128xbf16, #tpu.memory_space<vmem>>, vector<384x128xbf16>
    %70 = arith.extf %69 : vector<384x128xbf16> to vector<384x128xf32>
    %c0_19 = arith.constant 0 : index
    %c0_20 = arith.constant 0 : index
    %71 = vector.load %arg4[%c0_19, %c0_20] : memref<4x128xf32, #tpu.memory_space<vmem>>, vector<4x128xf32>
    %cst_21 = arith.constant dense<0.000000e+00> : vector<8x128xf32>
    %72 = tpu.matmul %68, %70, %cst_21 {dimension_numbers = #tpu.dot_dimension_numbers<[1], [0], [0], [1], [0, 0, 1, 1], [], []>} : vector<8x384xf32>, vector<384x128xf32>, vector<8x128xf32> -> vector<8x128xf32>
    %73 = vector.extract_strided_slice %71 {offsets = [0, 0], sizes = [1, 128], strides = [1, 1]} : vector<4x128xf32> to vector<1x128xf32>
    %74 = vector.broadcast %73 : vector<1x128xf32> to vector<8x128xf32>
    %75 = arith.addf %72, %74 : vector<8x128xf32>
    %c8_i32_22 = arith.constant 8 : i32
    %76 = tpu.dynamic_rotate %75 by %c8_i32_22 dim 1 : vector<8x128xf32>, i32 -> vector<8x128xf32>
    %77 = arith.addf %75, %76 : vector<8x128xf32>
    %c16_i32_23 = arith.constant 16 : i32
    %78 = tpu.dynamic_rotate %77 by %c16_i32_23 dim 1 : vector<8x128xf32>, i32 -> vector<8x128xf32>
    %79 = arith.addf %77, %78 : vector<8x128xf32>
    %c32_i32_24 = arith.constant 32 : i32
    %80 = tpu.dynamic_rotate %79 by %c32_i32_24 dim 1 : vector<8x128xf32>, i32 -> vector<8x128xf32>
    %81 = arith.addf %79, %80 : vector<8x128xf32>
    %c64_i32_25 = arith.constant 64 : i32
    %82 = tpu.dynamic_rotate %81 by %c64_i32_25 dim 1 : vector<8x128xf32>, i32 -> vector<8x128xf32>
    %83 = arith.addf %81, %82 : vector<8x128xf32>
    %cst_26 = arith.constant dense<0.000000e+00> : vector<128xf32>
    %84 = vector.multi_reduction <add>, %83, %cst_26 [0] : vector<8x128xf32> to vector<128xf32>
    %85 = vector.shape_cast %84 : vector<128xf32> to vector<1x128xf32>
    %cst_27 = arith.constant 7.812500e-03 : f32
    %86 = vector.broadcast %cst_27 : f32 to vector<1x128xf32>
    %87 = arith.mulf %85, %86 : vector<1x128xf32>
    %88 = vector.broadcast %87 : vector<1x128xf32> to vector<8x128xf32>
    %89 = arith.subf %75, %88 : vector<8x128xf32>
    %90 = arith.mulf %89, %89 : vector<8x128xf32>
    %c8_i32_28 = arith.constant 8 : i32
    %91 = tpu.dynamic_rotate %90 by %c8_i32_28 dim 1 : vector<8x128xf32>, i32 -> vector<8x128xf32>
    %92 = arith.addf %90, %91 : vector<8x128xf32>
    %c16_i32_29 = arith.constant 16 : i32
    %93 = tpu.dynamic_rotate %92 by %c16_i32_29 dim 1 : vector<8x128xf32>, i32 -> vector<8x128xf32>
    %94 = arith.addf %92, %93 : vector<8x128xf32>
    %c32_i32_30 = arith.constant 32 : i32
    %95 = tpu.dynamic_rotate %94 by %c32_i32_30 dim 1 : vector<8x128xf32>, i32 -> vector<8x128xf32>
    %96 = arith.addf %94, %95 : vector<8x128xf32>
    %c64_i32_31 = arith.constant 64 : i32
    %97 = tpu.dynamic_rotate %96 by %c64_i32_31 dim 1 : vector<8x128xf32>, i32 -> vector<8x128xf32>
    %98 = arith.addf %96, %97 : vector<8x128xf32>
    %cst_32 = arith.constant dense<0.000000e+00> : vector<128xf32>
    %99 = vector.multi_reduction <add>, %98, %cst_32 [0] : vector<8x128xf32> to vector<128xf32>
    %100 = vector.shape_cast %99 : vector<128xf32> to vector<1x128xf32>
    %cst_33 = arith.constant 7.812500e-03 : f32
    %101 = vector.broadcast %cst_33 : f32 to vector<1x128xf32>
    %102 = arith.mulf %100, %101 : vector<1x128xf32>
    %103 = vector.extract_strided_slice %71 {offsets = [1, 0], sizes = [1, 128], strides = [1, 1]} : vector<4x128xf32> to vector<1x128xf32>
    %cst_34 = arith.constant 9.99999974E-6 : f32
    %104 = vector.broadcast %cst_34 : f32 to vector<1x128xf32>
    %105 = arith.addf %102, %104 : vector<1x128xf32>
    %106 = math.rsqrt %105 : vector<1x128xf32>
    %107 = arith.mulf %103, %106 : vector<1x128xf32>
    %108 = vector.broadcast %107 : vector<1x128xf32> to vector<8x128xf32>
    %109 = arith.mulf %89, %108 : vector<8x128xf32>
    %110 = vector.extract_strided_slice %71 {offsets = [2, 0], sizes = [1, 128], strides = [1, 1]} : vector<4x128xf32> to vector<1x128xf32>
    %111 = vector.broadcast %110 : vector<1x128xf32> to vector<8x128xf32>
    %112 = arith.addf %109, %111 : vector<8x128xf32>
    %cst_35 = arith.constant 0.000000e+00 : f32
    %113 = vector.broadcast %cst_35 : f32 to vector<8x128xf32>
    %114 = arith.cmpf oge, %112, %113 : vector<8x128xf32>
    %115 = vector.extract_strided_slice %71 {offsets = [3, 0], sizes = [1, 128], strides = [1, 1]} : vector<4x128xf32> to vector<1x128xf32>
    %116 = vector.broadcast %115 : vector<1x128xf32> to vector<8x128xf32>
    %117 = arith.mulf %116, %112 : vector<8x128xf32>
    %118 = arith.select %114, %112, %117 : vector<8x128xi1>, vector<8x128xf32>
    %c0_36 = arith.constant 0 : index
    %c0_37 = arith.constant 0 : index
    %119 = vector.load %arg5[%c0_36, %c0_37] : memref<8x128xf32, #tpu.memory_space<vmem>>, vector<8x128xf32>
    tpu.vector_store %arg5[%c0_36, %c0_37], %118 {strides = array<i32>} : memref<8x128xf32, #tpu.memory_space<vmem>>, vector<8x128xf32>,
    return
  }
}

</mosaic_0001>

<llo_original>
// kernel: mul.32
$region0: #{mul.32}
  %s0 = inlined_call_operand.vmem [shape: f32[8,8,8,8], index: 0, kind: input, shape index: {}]
  %s1 = inlined_call_operand.vmem [shape: f32[64,64], index: 1, kind: output, shape index: {}]
  %v2 = vld [vmem:[%s0] ss:$8 sm:$0xf]
  %v3 = vld [vmem:[%s0] ss:$8 sm:$0xf0]
  %vm4 = vcmask 1047556
  %v5 = vsel %vm4, %v3, %v2
  %vm6 = vcmask 64512
  %7 = vst.msk [vmem:[%s1] sm:$0xff] %vm6, %v5
  %s8 = scalar_lea.vmem %s0, 64
  %v9 = vld [vmem:[%s8] ss:$8 sm:$0xf]
  %s10 = scalar_lea.vmem %s0, 64
  %v11 = vld [vmem:[%s10] ss:$8 sm:$0xf0]
  %vm12 = vcmask 1047556
  %v13 = vsel %vm12, %v11, %v9
  %vm14 = vcmask 64512
  %s15 = scalar_lea.vmem %s1, 8
  %16 = vst.msk [vmem:[%s15] sm:$0xff] %vm14, %v13
  %s17 = scalar_lea.vmem %s0, 128
  %v18 = vld [vmem:[%s17] ss:$8 sm:$0xf]
  %s19 = scalar_lea.vmem %s0, 128
  %v20 = vld [vmem:[%s19] ss:$8 sm:$0xf0]
  %vm21 = vcmask 1047556
  %v22 = vsel %vm21, %v20, %v18
  %vm23 = vcmask 64512
  %s24 = scalar_lea.vmem %s1, 16
  %25 = vst.msk [vmem:[%s24] sm:$0xff] %vm23, %v22
  %s26 = scalar_lea.vmem %s0, 192
  %v27 = vld [vmem:[%s26] ss:$8 sm:$0xf]
  %s28 = scalar_lea.vmem %s0, 192
  %v29 = vld [vmem:[%s28] ss:$8 sm:$0xf0]
  %vm30 = vcmask 1047556
  %v31 = vsel %vm30, %v29, %v27
  %vm32 = vcmask 64512
  %s33 = scalar_lea.vmem %s1, 24
  %34 = vst.msk [vmem:[%s33] sm:$0xff] %vm32, %v31
  %s35 = scalar_lea.vmem %s0, 256
  %v36 = vld [vmem:[%s35] ss:$8 sm:$0xf]
  %s37 = scalar_lea.vmem %s0, 256
  %v38 = vld [vmem:[%s37] ss:$8 sm:$0xf0]
  %vm39 = vcmask 1047556
  %v40 = vsel %vm39, %v38, %v36
  %vm41 = vcmask 64512
  %s42 = scalar_lea.vmem %s1, 32
  %43 = vst.msk [vmem:[%s42] sm:$0xff] %vm41, %v40
  %s44 = scalar_lea.vmem %s0, 320
  %v45 = vld [vmem:[%s44] ss:$8 sm:$0xf]
  %s46 = scalar_lea.vmem %s0, 320
  %v47 = vld [vmem:[%s46] ss:$8 sm:$0xf0]
  %vm48 = vcmask 1047556
  %v49 = vsel %vm48, %v47, %v45
  %vm50 = vcmask 64512
  %s51 = scalar_lea.vmem %s1, 40
  %52 = vst.msk [vmem:[%s51] sm:$0xff] %vm50, %v49
  %s53 = scalar_lea.vmem %s0, 384
  %v54 = vld [vmem:[%s53] ss:$8 sm:$0xf]
  %s55 = scalar_lea.vmem %s0, 384
  %v56 = vld [vmem:[%s55] ss:$8 sm:$0xf0]
  %vm57 = vcmask 1047556
  %v58 = vsel %vm57, %v56, %v54
  %vm59 = vcmask 64512
  %s60 = scalar_lea.vmem %s1, 48
  %61 = vst.msk [vmem:[%s60] sm:$0xff] %vm59, %v58
  %s62 = scalar_lea.vmem %s0, 448
  %v63 = vld [vmem:[%s62] ss:$8 sm:$0xf]
  %s64 = scalar_lea.vmem %s0, 448
  %v65 = vld [vmem:[%s64] ss:$8 sm:$0xf0]
  %vm66 = vcmask 1047556
  %v67 = vsel %vm66, %v65, %v63
  %vm68 = vcmask 64512
  %s69 = scalar_lea.vmem %s1, 56
  %70 = vst.msk [vmem:[%s69] sm:$0xff] %vm68, %v67
  %s71 = scalar_lea.vmem %s0, 7
  %v72 = vld [vmem:[%s71] ss:$8 sm:$0xf]
  %s73 = scalar_lea.vmem %s0, 7
  %v74 = vld [vmem:[%s73] ss:$8 sm:$0xf0]
  %vm75 = vcmask 1047556
  %v76 = vsel %vm75, %v74, %v72
  %77 = vrot.lane.b32.xlu0 %v76, 56
  %v78 = vpop.permute.xlu0 %77
  %vm79 = vcmask 523712
  %80 = vst.msk [vmem:[%s1] sm:$0xff] %vm79, %v78
  %s81 = scalar_lea.vmem %s0, 263
  %v82 = vld [vmem:[%s81] ss:$8 sm:$0xf]
  %s83 = scalar_lea.vmem %s0, 263
  %v84 = vld [vmem:[%s83] ss:$8 sm:$0xf0]
  %vm85 = vcmask 1047556
  %v86 = vsel %vm85, %v84, %v82
  %87 = vrot.lane.b32.xlu0 %v86, 56
  %v88 = vpop.permute.xlu0 %87
  %vm89 = vcmask 523712
  %s90 = scalar_lea.vmem %s1, 32
  %91 = vst.msk [vmem:[%s90] sm:$0xff] %vm89, %v88
  %s92 = scalar_lea.vmem %s0, 71
  %v93 = vld [vmem:[%s92] ss:$8 sm:$0xf]
  %s94 = scalar_lea.vmem %s0, 71
  %v95 = vld [vmem:[%s94] ss:$8 sm:$0xf0]
  %vm96 = vcmask 1047556
  %v97 = vsel %vm96, %v95, %v93
  %98 = vrot.lane.b32.xlu0 %v97, 56
  %v99 = vpop.permute.xlu0 %98
  %vm100 = vcmask 523712
  %s101 = scalar_lea.vmem %s1, 8
  %102 = vst.msk [vmem:[%s101] sm:$0xff] %vm100, %v99
  %s103 = scalar_lea.vmem %s0, 327
  %v104 = vld [vmem:[%s103] ss:$8 sm:$0xf]
  %s105 = scalar_lea.vmem %s0, 327
  %v106 = vld [vmem:[%s105] ss:$8 sm:$0xf0]
  %vm107 = vcmask 1047556
  %v108 = vsel %vm107, %v106, %v104
  %109 = vrot.lane.b32.xlu0 %v108, 56
  %v110 = vpop.permute.xlu0 %109
  %vm111 = vcmask 523712
  %s112 = scalar_lea.vmem %s1, 40
  %113 = vst.msk [vmem:[%s112] sm:$0xff] %vm111, %v110
  %s114 = scalar_lea.vmem %s0, 135
  %v115 = vld [vmem:[%s114] ss:$8 sm:$0xf]
  %s116 = scalar_lea.vmem %s0, 135
  %v117 = vld [vmem:[%s116] ss:$8 sm:$0xf0]
  %vm118 = vcmask 1047556
  %v119 = vsel %vm118, %v117, %v115
  %120 = vrot.lane.b32.xlu0 %v119, 56
  %v121 = vpop.permute.xlu0 %120
  %vm122 = vcmask 523712
  %s123 = scalar_lea.vmem %s1, 16
  %124 = vst.msk [vmem:[%s123] sm:$0xff] %vm122, %v121
  %s125 = scalar_lea.vmem %s0, 391
  %v126 = vld [vmem:[%s125] ss:$8 sm:$0xf]
  %s127 = scalar_lea.vmem %s0, 391
  %v128 = vld [vmem:[%s127] ss:$8 sm:$0xf0]
  %vm129 = vcmask 1047556
  %v130 = vsel %vm129, %v128, %v126
  %131 = vrot.lane.b32.xlu0 %v130, 56
  %v132 = vpop.permute.xlu0 %131
  %vm133 = vcmask 523712
  %s134 = scalar_lea.vmem %s1, 48
  %135 = vst.msk [vmem:[%s134] sm:$0xff] %vm133, %v132
  %s136 = scalar_lea.vmem %s0, 199
  %v137 = vld [vmem:[%s136] ss:$8 sm:$0xf]
  %s138 = scalar_lea.vmem %s0, 199
  %v139 = vld [vmem:[%s138] ss:$8 sm:$0xf0]
  %vm140 = vcmask 1047556
  %v141 = vsel %vm140, %v139, %v137
  %142 = vrot.lane.b32.xlu0 %v141, 56
  %v143 = vpop.permute.xlu0 %142
  %vm144 = vcmask 523712
  %s145 = scalar_lea.vmem %s1, 24
  %146 = vst.msk [vmem:[%s145] sm:$0xff] %vm144, %v143
  %s147 = scalar_lea.vmem %s0, 455
  %v148 = vld [vmem:[%s147] ss:$8 sm:$0xf]
  %s149 = scalar_lea.vmem %s0, 455
  %v150 = vld [vmem:[%s149] ss:$8 sm:$0xf0]
  %vm151 = vcmask 1047556
  %v152 = vsel %vm151, %v150, %v148
  %153 = vrot.lane.b32.xlu0 %v152, 56
  %v154 = vpop.permute.xlu0 %153
  %vm155 = vcmask 523712
  %s156 = scalar_lea.vmem %s1, 56
  %157 = vst.msk [vmem:[%s156] sm:$0xff] %vm155, %v154
  %s158 = scalar_lea.vmem %s0, 6
  %v159 = vld [vmem:[%s158] ss:$8 sm:$0xf]
  %s160 = scalar_lea.vmem %s0, 6
  %v161 = vld [vmem:[%s160] ss:$8 sm:$0xf0]
  %vm162 = vcmask 1047556
  %v163 = vsel %vm162, %v161, %v159
  %164 = vrot.lane.b32.xlu0 %v163, 48
  %v165 = vpop.permute.xlu0 %164
  %vm166 = vcmask 458112
  %167 = vst.msk [vmem:[%s1] sm:$0xff] %vm166, %v165
  %s168 = scalar_lea.vmem %s0, 262
  %v169 = vld [vmem:[%s168] ss:$8 sm:$0xf]
  %s170 = scalar_lea.vmem %s0, 262
  %v171 = vld [vmem:[%s170] ss:$8 sm:$0xf0]
  %vm172 = vcmask 1047556
  %v173 = vsel %vm172, %v171, %v169
  %174 = vrot.lane.b32.xlu0 %v173, 48
  %v175 = vpop.permute.xlu0 %174
  %vm176 = vcmask 458112
  %s177 = scalar_lea.vmem %s1, 32
  %178 = vst.msk [vmem:[%s177] sm:$0xff] %vm176, %v175
  %s179 = scalar_lea.vmem %s0, 70
  %v180 = vld [vmem:[%s179] ss:$8 sm:$0xf]
  %s181 = scalar_lea.vmem %s0, 70
  %v182 = vld [vmem:[%s181] ss:$8 sm:$0xf0]
  %vm183 = vcmask 1047556
  %v184 = vsel %vm183, %v182, %v180
  %185 = vrot.lane.b32.xlu0 %v184, 48
  %v186 = vpop.permute.xlu0 %185
  %vm187 = vcmask 458112
  %s188 = scalar_lea.vmem %s1, 8
  %189 = vst.msk [vmem:[%s188] sm:$0xff] %vm187, %v186
  %s190 = scalar_lea.vmem %s0, 326
  %v191 = vld [vmem:[%s190] ss:$8 sm:$0xf]
  %s192 = scalar_lea.vmem %s0, 326
  %v193 = vld [vmem:[%s192] ss:$8 sm:$0xf0]
  %vm194 = vcmask 1047556
  %v195 = vsel %vm194, %v193, %v191
  %196 = vrot.lane.b32.xlu0 %v195, 48
  %v197 = vpop.permute.xlu0 %196
  %vm198 = vcmask 458112
  %s199 = scalar_lea.vmem %s1, 40
  %200 = vst.msk [vmem:[%s199] sm:$0xff] %vm198, %v197
  %s201 = scalar_lea.vmem %s0, 134
  %v202 = vld [vmem:[%s201] ss:$8 sm:$0xf]
  %s203 = scalar_lea.vmem %s0, 134
  %v204 = vld [vmem:[%s203] ss:$8 sm:$0xf0]
  %vm205 = vcmask 1047556
  %v206 = vsel %vm205, %v204, %v202
  %207 = vrot.lane.b32.xlu0 %v206, 48
  %v208 = vpop.permute.xlu0 %207
  %vm209 = vcmask 458112
  %s210 = scalar_lea.vmem %s1, 16
  %211 = vst.msk [vmem:[%s210] sm:$0xff] %vm209, %v208
  %s212 = scalar_lea.vmem %s0, 390
  %v213 = vld [vmem:[%s212] ss:$8 sm:$0xf]
  %s214 = scalar_lea.vmem %s0, 390
  %v215 = vld [vmem:[%s214] ss:$8 sm:$0xf0]
  %vm216 = vcmask 1047556
  %v217 = vsel %vm216, %v215, %v213
  %218 = vrot.lane.b32.xlu0 %v217, 48
  %v219 = vpop.permute.xlu0 %218
  %vm220 = vcmask 458112
  %s221 = scalar_lea.vmem %s1, 48
  %222 = vst.msk [vmem:[%s221] sm:$0xff] %vm220, %v219
  %s223 = scalar_lea.vmem %s0, 198
  %v224 = vld [vmem:[%s223] ss:$8 sm:$0xf]
  %s225 = scalar_lea.vmem %s0, 198
  %v226 = vld [vmem:[%s225] ss:$8 sm:$0xf0]
  %vm227 = vcmask 1047556
  %v228 = vsel %vm227, %v226, %v224
  %229 = vrot.lane.b32.xlu0 %v228, 48
  %v230 = vpop.permute.xlu0 %229
  %vm231 = vcmask 458112
  %s232 = scalar_lea.vmem %s1, 24
  %233 = vst.msk [vmem:[%s232] sm:$0xff] %vm231, %v230
  %s234 = scalar_lea.vmem %s0, 454
  %v235 = vld [vmem:[%s234] ss:$8 sm:$0xf]
  %s236 = scalar_lea.vmem %s0, 454
  %v237 = vld [vmem:[%s236] ss:$8 sm:$0xf0]
  %vm238 = vcmask 1047556
  %v239 = vsel %vm238, %v237, %v235
  %240 = vrot.lane.b32.xlu0 %v239, 48
  %v241 = vpop.permute.xlu0 %240
  %vm242 = vcmask 458112
  %s243 = scalar_lea.vmem %s1, 56
  %244 = vst.msk [vmem:[%s243] sm:$0xff] %vm242, %v241
  %s245 = scalar_lea.vmem %s0, 5
  %v246 = vld [vmem:[%s245] ss:$8 sm:$0xf]
  %s247 = scalar_lea.vmem %s0, 5
  %v248 = vld [vmem:[%s247] ss:$8 sm:$0xf0]
  %vm249 = vcmask 1047556
  %v250 = vsel %vm249, %v248, %v246
  %251 = vrot.lane.b32.xlu0 %v250, 40
  %v252 = vpop.permute.xlu0 %251
  %vm253 = vcmask 392512
  %254 = vst.msk [vmem:[%s1] sm:$0xff] %vm253, %v252
  %s255 = scalar_lea.vmem %s0, 261
  %v256 = vld [vmem:[%s255] ss:$8 sm:$0xf]
  %s257 = scalar_lea.vmem %s0, 261
  %v258 = vld [vmem:[%s257] ss:$8 sm:$0xf0]
  %vm259 = vcmask 1047556
  %v260 = vsel %vm259, %v258, %v256
  %261 = vrot.lane.b32.xlu0 %v260, 40
  %v262 = vpop.permute.xlu0 %261
  %vm263 = vcmask 392512
  %s264 = scalar_lea.vmem %s1, 32
  %265 = vst.msk [vmem:[%s264] sm:$0xff] %vm263, %v262
  %s266 = scalar_lea.vmem %s0, 69
  %v267 = vld [vmem:[%s266] ss:$8 sm:$0xf]
  %s268 = scalar_lea.vmem %s0, 69
  %v269 = vld [vmem:[%s268] ss:$8 sm:$0xf0]
  %vm270 = vcmask 1047556
  %v271 = vsel %vm270, %v269, %v267
  %272 = vrot.lane.b32.xlu0 %v271, 40
  %v273 = vpop.permute.xlu0 %272
  %vm274 = vcmask 392512
  %s275 = scalar_lea.vmem %s1, 8
  %276 = vst.msk [vmem:[%s275] sm:$0xff] %vm274, %v273
  %s277 = scalar_lea.vmem %s0, 325
  %v278 = vld [vmem:[%s277] ss:$8 sm:$0xf]
  %s279 = scalar_lea.vmem %s0, 325
  %v280 = vld [vmem:[%s279] ss:$8 sm:$0xf0]
  %vm281 = vcmask 1047556
  %v282 = vsel %vm281, %v280, %v278
  %283 = vrot.lane.b32.xlu0 %v282, 40
  %v284 = vpop.permute.xlu0 %283
  %vm285 = vcmask 392512
  %s286 = scalar_lea.vmem %s1, 40
  %287 = vst.msk [vmem:[%s286] sm:$0xff] %vm285, %v284
  %s288 = scalar_lea.vmem %s0, 133
  %v289 = vld [vmem:[%s288] ss:$8 sm:$0xf]
  %s290 = scalar_lea.vmem %s0, 133
  %v291 = vld [vmem:[%s290] ss:$8 sm:$0xf0]
  %vm292 = vcmask 1047556
  %v293 = vsel %vm292, %v291, %v289
  %294 = vrot.lane.b32.xlu0 %v293, 40
  %v295 = vpop.permute.xlu0 %294
  %vm296 = vcmask 392512
  %s297 = scalar_lea.vmem %s1, 16
  %298 = vst.msk [vmem:[%s297] sm:$0xff] %vm296, %v295
  %s299 = scalar_lea.vmem %s0, 389
  %v300 = vld [vmem:[%s299] ss:$8 sm:$0xf]
  %s301 = scalar_lea.vmem %s0, 389
  %v302 = vld [vmem:[%s301] ss:$8 sm:$0xf0]
  %vm303 = vcmask 1047556
  %v304 = vsel %vm303, %v302, %v300
  %305 = vrot.lane.b32.xlu0 %v304, 40
  %v306 = vpop.permute.xlu0 %305
  %vm307 = vcmask 392512
  %s308 = scalar_lea.vmem %s1, 48
  %309 = vst.msk [vmem:[%s308] sm:$0xff] %vm307, %v306
  %s310 = scalar_lea.vmem %s0, 197
  %v311 = vld [vmem:[%s310] ss:$8 sm:$0xf]
  %s312 = scalar_lea.vmem %s0, 197
  %v313 = vld [vmem:[%s312] ss:$8 sm:$0xf0]
  %vm314 = vcmask 1047556
  %v315 = vsel %vm314, %v313, %v311
  %316 = vrot.lane.b32.xlu0 %v315, 40
  %v317 = vpop.permute.xlu0 %316
  %vm318 = vcmask 392512
  %s319 = scalar_lea.vmem %s1, 24
  %320 = vst.msk [vmem:[%s319] sm:$0xff] %vm318, %v317
  %s321 = scalar_lea.vmem %s0, 453
  %v322 = vld [vmem:[%s321] ss:$8 sm:$0xf]
  %s323 = scalar_lea.vmem %s0, 453
  %v324 = vld [vmem:[%s323] ss:$8 sm:$0xf0]
  %vm325 = vcmask 1047556
  %v326 = vsel %vm325, %v324, %v322
  %327 = vrot.lane.b32.xlu0 %v326, 40
  %v328 = vpop.permute.xlu0 %327
  %vm329 = vcmask 392512
  %s330 = scalar_lea.vmem %s1, 56
  %331 = vst.msk [vmem:[%s330] sm:$0xff] %vm329, %v328
  %s332 = scalar_lea.vmem %s0, 4
  %v333 = vld [vmem:[%s332] ss:$8 sm:$0xf]
  %s334 = scalar_lea.vmem %s0, 4
  %v335 = vld [vmem:[%s334] ss:$8 sm:$0xf0]
  %vm336 = vcmask 1047556
  %v337 = vsel %vm336, %v335, %v333
  %338 = vrot.lane.b32.xlu0 %v337, 32
  %v339 = vpop.permute.xlu0 %338
  %vm340 = vcmask 326912
  %341 = vst.msk [vmem:[%s1] sm:$0xff] %vm340, %v339
  %s342 = scalar_lea.vmem %s0, 260
  %v343 = vld [vmem:[%s342] ss:$8 sm:$0xf]
  %s344 = scalar_lea.vmem %s0, 260
  %v345 = vld [vmem:[%s344] ss:$8 sm:$0xf0]
  %vm346 = vcmask 1047556
  %v347 = vsel %vm346, %v345, %v343
  %348 = vrot.lane.b32.xlu0 %v347, 32
  %v349 = vpop.permute.xlu0 %348
  %vm350 = vcmask 326912
  %s351 = scalar_lea.vmem %s1, 32
  %352 = vst.msk [vmem:[%s351] sm:$0xff] %vm350, %v349
  %s353 = scalar_lea.vmem %s0, 68
  %v354 = vld [vmem:[%s353] ss:$8 sm:$0xf]
  %s355 = scalar_lea.vmem %s0, 68
  %v356 = vld [vmem:[%s355] ss:$8 sm:$0xf0]
  %vm357 = vcmask 1047556
  %v358 = vsel %vm357, %v356, %v354
  %359 = vrot.lane.b32.xlu0 %v358, 32
  %v360 = vpop.permute.xlu0 %359
  %vm361 = vcmask 326912
  %s362 = scalar_lea.vmem %s1, 8
  %363 = vst.msk [vmem:[%s362] sm:$0xff] %vm361, %v360
  %s364 = scalar_lea.vmem %s0, 324
  %v365 = vld [vmem:[%s364] ss:$8 sm:$0xf]
  %s366 = scalar_lea.vmem %s0, 324
  %v367 = vld [vmem:[%s366] ss:$8 sm:$0xf0]
  %vm368 = vcmask 1047556
  %v369 = vsel %vm368, %v367, %v365
  %370 = vrot.lane.b32.xlu0 %v369, 32
  %v371 = vpop.permute.xlu0 %370
  %vm372 = vcmask 326912
  %s373 = scalar_lea.vmem %s1, 40
  %374 = vst.msk [vmem:[%s373] sm:$0xff] %vm372, %v371
  %s375 = scalar_lea.vmem %s0, 132
  %v376 = vld [vmem:[%s375] ss:$8 sm:$0xf]
  %s377 = scalar_lea.vmem %s0, 132
  %v378 = vld [vmem:[%s377] ss:$8 sm:$0xf0]
  %vm379 = vcmask 1047556
  %v380 = vsel %vm379, %v378, %v376
  %381 = vrot.lane.b32.xlu0 %v380, 32
  %v382 = vpop.permute.xlu0 %381
  %vm383 = vcmask 326912
  %s384 = scalar_lea.vmem %s1, 16
  %385 = vst.msk [vmem:[%s384] sm:$0xff] %vm383, %v382
  %s386 = scalar_lea.vmem %s0, 388
  %v387 = vld [vmem:[%s386] ss:$8 sm:$0xf]
  %s388 = scalar_lea.vmem %s0, 388
  %v389 = vld [vmem:[%s388] ss:$8 sm:$0xf0]
  %vm390 = vcmask 1047556
  %v391 = vsel %vm390, %v389, %v387
  %392 = vrot.lane.b32.xlu0 %v391, 32
  %v393 = vpop.permute.xlu0 %392
  %vm394 = vcmask 326912
  %s395 = scalar_lea.vmem %s1, 48
  %396 = vst.msk [vmem:[%s395] sm:$0xff] %vm394, %v393
  %s397 = scalar_lea.vmem %s0, 196
  %v398 = vld [vmem:[%s397] ss:$8 sm:$0xf]
  %s399 = scalar_lea.vmem %s0, 196
  %v400 = vld [vmem:[%s399] ss:$8 sm:$0xf0]
  %vm401 = vcmask 1047556
  %v402 = vsel %vm401, %v400, %v398
  %403 = vrot.lane.b32.xlu0 %v402, 32
  %v404 = vpop.permute.xlu0 %403
  %vm405 = vcmask 326912
  %s406 = scalar_lea.vmem %s1, 24
  %407 = vst.msk [vmem:[%s406] sm:$0xff] %vm405, %v404
  %s408 = scalar_lea.vmem %s0, 452
  %v409 = vld [vmem:[%s408] ss:$8 sm:$0xf]
  %s410 = scalar_lea.vmem %s0, 452
  %v411 = vld [vmem:[%s410] ss:$8 sm:$0xf0]
  %vm412 = vcmask 1047556
  %v413 = vsel %vm412, %v411, %v409
  %414 = vrot.lane.b32.xlu0 %v413, 32
  %v415 = vpop.permute.xlu0 %414
  %vm416 = vcmask 326912
  %s417 = scalar_lea.vmem %s1, 56
  %418 = vst.msk [vmem:[%s417] sm:$0xff] %vm416, %v415
  %s419 = scalar_lea.vmem %s0, 3
  %v420 = vld [vmem:[%s419] ss:$8 sm:$0xf]
  %s421 = scalar_lea.vmem %s0, 3
  %v422 = vld [vmem:[%s421] ss:$8 sm:$0xf0]
  %vm423 = vcmask 1047556
  %v424 = vsel %vm423, %v422, %v420
  %425 = vrot.lane.b32.xlu0 %v424, 24
  %v426 = vpop.permute.xlu0 %425
  %vm427 = vcmask 261312
  %428 = vst.msk [vmem:[%s1] sm:$0xff] %vm427, %v426
  %s429 = scalar_lea.vmem %s0, 259
  %v430 = vld [vmem:[%s429] ss:$8 sm:$0xf]
  %s431 = scalar_lea.vmem %s0, 259
  %v432 = vld [vmem:[%s431] ss:$8 sm:$0xf0]
  %vm433 = vcmask 1047556
  %v434 = vsel %vm433, %v432, %v430
  %435 = vrot.lane.b32.xlu0 %v434, 24
  %v436 = vpop.permute.xlu0 %435
  %vm437 = vcmask 261312
  %s438 = scalar_lea.vmem %s1, 32
  %439 = vst.msk [vmem:[%s438] sm:$0xff] %vm437, %v436
  %s440 = scalar_lea.vmem %s0, 67
  %v441 = vld [vmem:[%s440] ss:$8 sm:$0xf]
  %s442 = scalar_lea.vmem %s0, 67
  %v443 = vld [vmem:[%s442] ss:$8 sm:$0xf0]
  %vm444 = vcmask 1047556
  %v445 = vsel %vm444, %v443, %v441
  %446 = vrot.lane.b32.xlu0 %v445, 24
  %v447 = vpop.permute.xlu0 %446
  %vm448 = vcmask 261312
  %s449 = scalar_lea.vmem %s1, 8
  %450 = vst.msk [vmem:[%s449] sm:$0xff] %vm448, %v447
  %s451 = scalar_lea.vmem %s0, 323
  %v452 = vld [vmem:[%s451] ss:$8 sm:$0xf]
  %s453 = scalar_lea.vmem %s0, 323
  %v454 = vld [vmem:[%s453] ss:$8 sm:$0xf0]
  %vm455 = vcmask 1047556
  %v456 = vsel %vm455, %v454, %v452
  %457 = vrot.lane.b32.xlu0 %v456, 24
  %v458 = vpop.permute.xlu0 %457
  %vm459 = vcmask 261312
  %s460 = scalar_lea.vmem %s1, 40
  %461 = vst.msk [vmem:[%s460] sm:$0xff] %vm459, %v458
  %s462 = scalar_lea.vmem %s0, 131
  %v463 = vld [vmem:[%s462] ss:$8 sm:$0xf]
  %s464 = scalar_lea.vmem %s0, 131
  %v465 = vld [vmem:[%s464] ss:$8 sm:$0xf0]
  %vm466 = vcmask 1047556
  %v467 = vsel %vm466, %v465, %v463
  %468 = vrot.lane.b32.xlu0 %v467, 24
  %v469 = vpop.permute.xlu0 %468
  %vm470 = vcmask 261312
  %s471 = scalar_lea.vmem %s1, 16
  %472 = vst.msk [vmem:[%s471] sm:$0xff] %vm470, %v469
  %s473 = scalar_lea.vmem %s0, 387
  %v474 = vld [vmem:[%s473] ss:$8 sm:$0xf]
  %s475 = scalar_lea.vmem %s0, 387
  %v476 = vld [vmem:[%s475] ss:$8 sm:$0xf0]
  %vm477 = vcmask 1047556
  %v478 = vsel %vm477, %v476, %v474
  %479 = vrot.lane.b32.xlu0 %v478, 24
  %v480 = vpop.permute.xlu0 %479
  %vm481 = vcmask 261312
  %s482 = scalar_lea.vmem %s1, 48
  %483 = vst.msk [vmem:[%s482] sm:$0xff] %vm481, %v480
  %s484 = scalar_lea.vmem %s0, 195
  %v485 = vld [vmem:[%s484] ss:$8 sm:$0xf]
  %s486 = scalar_lea.vmem %s0, 195
  %v487 = vld [vmem:[%s486] ss:$8 sm:$0xf0]
  %vm488 = vcmask 1047556
  %v489 = vsel %vm488, %v487, %v485
  %490 = vrot.lane.b32.xlu0 %v489, 24
  %v491 = vpop.permute.xlu0 %490
  %vm492 = vcmask 261312
  %s493 = scalar_lea.vmem %s1, 24
  %494 = vst.msk [vmem:[%s493] sm:$0xff] %vm492, %v491
  %s495 = scalar_lea.vmem %s0, 451
  %v496 = vld [vmem:[%s495] ss:$8 sm:$0xf]
  %s497 = scalar_lea.vmem %s0, 451
  %v498 = vld [vmem:[%s497] ss:$8 sm:$0xf0]
  %vm499 = vcmask 1047556
  %v500 = vsel %vm499, %v498, %v496
  %501 = vrot.lane.b32.xlu0 %v500, 24
  %v502 = vpop.permute.xlu0 %501
  %vm503 = vcmask 261312
  %s504 = scalar_lea.vmem %s1, 56
  %505 = vst.msk [vmem:[%s504] sm:$0xff] %vm503, %v502
  %s506 = scalar_lea.vmem %s0, 2
  %v507 = vld [vmem:[%s506] ss:$8 sm:$0xf]
  %s508 = scalar_lea.vmem %s0, 2
  %v509 = vld [vmem:[%s508] ss:$8 sm:$0xf0]
  %vm510 = vcmask 1047556
  %v511 = vsel %vm510, %v509, %v507
  %512 = vrot.lane.b32.xlu0 %v511, 16
  %v513 = vpop.permute.xlu0 %512
  %vm514 = vcmask 195712
  %515 = vst.msk [vmem:[%s1] sm:$0xff] %vm514, %v513
  %s516 = scalar_lea.vmem %s0, 258
  %v517 = vld [vmem:[%s516] ss:$8 sm:$0xf]
  %s518 = scalar_lea.vmem %s0, 258
  %v519 = vld [vmem:[%s518] ss:$8 sm:$0xf0]
  %vm520 = vcmask 1047556
  %v521 = vsel %vm520, %v519, %v517
  %522 = vrot.lane.b32.xlu0 %v521, 16
  %v523 = vpop.permute.xlu0 %522
  %vm524 = vcmask 195712
  %s525 = scalar_lea.vmem %s1, 32
  %526 = vst.msk [vmem:[%s525] sm:$0xff] %vm524, %v523
  %s527 = scalar_lea.vmem %s0, 66
  %v528 = vld [vmem:[%s527] ss:$8 sm:$0xf]
  %s529 = scalar_lea.vmem %s0, 66
  %v530 = vld [vmem:[%s529] ss:$8 sm:$0xf0]
  %vm531 = vcmask 1047556
  %v532 = vsel %vm531, %v530, %v528
  %533 = vrot.lane.b32.xlu0 %v532, 16
  %v534 = vpop.permute.xlu0 %533
  %vm535 = vcmask 195712
  %s536 = scalar_lea.vmem %s1, 8
  %537 = vst.msk [vmem:[%s536] sm:$0xff] %vm535, %v534
  %s538 = scalar_lea.vmem %s0, 322
  %v539 = vld [vmem:[%s538] ss:$8 sm:$0xf]
  %s540 = scalar_lea.vmem %s0, 322
  %v541 = vld [vmem:[%s540] ss:$8 sm:$0xf0]
  %vm542 = vcmask 1047556
  %v543 = vsel %vm542, %v541, %v539
  %544 = vrot.lane.b32.xlu0 %v543, 16
  %v545 = vpop.permute.xlu0 %544
  %vm546 = vcmask 195712
  %s547 = scalar_lea.vmem %s1, 40
  %548 = vst.msk [vmem:[%s547] sm:$0xff] %vm546, %v545
  %s549 = scalar_lea.vmem %s0, 130
  %v550 = vld [vmem:[%s549] ss:$8 sm:$0xf]
  %s551 = scalar_lea.vmem %s0, 130
  %v552 = vld [vmem:[%s551] ss:$8 sm:$0xf0]
  %vm553 = vcmask 1047556
  %v554 = vsel %vm553, %v552, %v550
  %555 = vrot.lane.b32.xlu0 %v554, 16
  %v556 = vpop.permute.xlu0 %555
  %vm557 = vcmask 195712
  %s558 = scalar_lea.vmem %s1, 16
  %559 = vst.msk [vmem:[%s558] sm:$0xff] %vm557, %v556
  %s560 = scalar_lea.vmem %s0, 386
  %v561 = vld [vmem:[%s560] ss:$8 sm:$0xf]
  %s562 = scalar_lea.vmem %s0, 386
  %v563 = vld [vmem:[%s562] ss:$8 sm:$0xf0]
  %vm564 = vcmask 1047556
  %v565 = vsel %vm564, %v563, %v561
  %566 = vrot.lane.b32.xlu0 %v565, 16
  %v567 = vpop.permute.xlu0 %566
  %vm568 = vcmask 195712
  %s569 = scalar_lea.vmem %s1, 48
  %570 = vst.msk [vmem:[%s569] sm:$0xff] %vm568, %v567
  %s571 = scalar_lea.vmem %s0, 194
  %v572 = vld [vmem:[%s571] ss:$8 sm:$0xf]
  %s573 = scalar_lea.vmem %s0, 194
  %v574 = vld [vmem:[%s573] ss:$8 sm:$0xf0]
  %vm575 = vcmask 1047556
  %v576 = vsel %vm575, %v574, %v572
  %577 = vrot.lane.b32.xlu0 %v576, 16
  %v578 = vpop.permute.xlu0 %577
  %vm579 = vcmask 195712
  %s580 = scalar_lea.vmem %s1, 24
  %581 = vst.msk [vmem:[%s580] sm:$0xff] %vm579, %v578
  %s582 = scalar_lea.vmem %s0, 450
  %v583 = vld [vmem:[%s582] ss:$8 sm:$0xf]
  %s584 = scalar_lea.vmem %s0, 450
  %v585 = vld [vmem:[%s584] ss:$8 sm:$0xf0]
  %vm586 = vcmask 1047556
  %v587 = vsel %vm586, %v585, %v583
  %588 = vrot.lane.b32.xlu0 %v587, 16
  %v589 = vpop.permute.xlu0 %588
  %vm590 = vcmask 195712
  %s591 = scalar_lea.vmem %s1, 56
  %592 = vst.msk [vmem:[%s591] sm:$0xff] %vm590, %v589
  %s593 = scalar_lea.vmem %s0, 1
  %v594 = vld [vmem:[%s593] ss:$8 sm:$0xf]
  %s595 = scalar_lea.vmem %s0, 1
  %v596 = vld [vmem:[%s595] ss:$8 sm:$0xf0]
  %vm597 = vcmask 1047556
  %v598 = vsel %vm597, %v596, %v594
  %599 = vrot.lane.b32.xlu0 %v598, 8
  %v600 = vpop.permute.xlu0 %599
  %vm601 = vcmask 130112
  %602 = vst.msk [vmem:[%s1] sm:$0xff] %vm601, %v600
  %s603 = scalar_lea.vmem %s0, 257
  %v604 = vld [vmem:[%s603] ss:$8 sm:$0xf]
  %s605 = scalar_lea.vmem %s0, 257
  %v606 = vld [vmem:[%s605] ss:$8 sm:$0xf0]
  %vm607 = vcmask 1047556
  %v608 = vsel %vm607, %v606, %v604
  %609 = vrot.lane.b32.xlu0 %v608, 8
  %v610 = vpop.permute.xlu0 %609
  %vm611 = vcmask 130112
  %s612 = scalar_lea.vmem %s1, 32
  %613 = vst.msk [vmem:[%s612] sm:$0xff] %vm611, %v610
  %s614 = scalar_lea.vmem %s0, 65
  %v615 = vld [vmem:[%s614] ss:$8 sm:$0xf]
  %s616 = scalar_lea.vmem %s0, 65
  %v617 = vld [vmem:[%s616] ss:$8 sm:$0xf0]
  %vm618 = vcmask 1047556
  %v619 = vsel %vm618, %v617, %v615
  %620 = vrot.lane.b32.xlu0 %v619, 8
  %v621 = vpop.permute.xlu0 %620
  %vm622 = vcmask 130112
  %s623 = scalar_lea.vmem %s1, 8
  %624 = vst.msk [vmem:[%s623] sm:$0xff] %vm622, %v621
  %s625 = scalar_lea.vmem %s0, 321
  %v626 = vld [vmem:[%s625] ss:$8 sm:$0xf]
  %s627 = scalar_lea.vmem %s0, 321
  %v628 = vld [vmem:[%s627] ss:$8 sm:$0xf0]
  %vm629 = vcmask 1047556
  %v630 = vsel %vm629, %v628, %v626
  %631 = vrot.lane.b32.xlu0 %v630, 8
  %v632 = vpop.permute.xlu0 %631
  %vm633 = vcmask 130112
  %s634 = scalar_lea.vmem %s1, 40
  %635 = vst.msk [vmem:[%s634] sm:$0xff] %vm633, %v632
  %s636 = scalar_lea.vmem %s0, 129
  %v637 = vld [vmem:[%s636] ss:$8 sm:$0xf]
  %s638 = scalar_lea.vmem %s0, 129
  %v639 = vld [vmem:[%s638] ss:$8 sm:$0xf0]
  %vm640 = vcmask 1047556
  %v641 = vsel %vm640, %v639, %v637
  %642 = vrot.lane.b32.xlu0 %v641, 8
  %v643 = vpop.permute.xlu0 %642
  %vm644 = vcmask 130112
  %s645 = scalar_lea.vmem %s1, 16
  %646 = vst.msk [vmem:[%s645] sm:$0xff] %vm644, %v643
  %s647 = scalar_lea.vmem %s0, 385
  %v648 = vld [vmem:[%s647] ss:$8 sm:$0xf]
  %s649 = scalar_lea.vmem %s0, 385
  %v650 = vld [vmem:[%s649] ss:$8 sm:$0xf0]
  %vm651 = vcmask 1047556
  %v652 = vsel %vm651, %v650, %v648
  %653 = vrot.lane.b32.xlu0 %v652, 8
  %v654 = vpop.permute.xlu0 %653
  %vm655 = vcmask 130112
  %s656 = scalar_lea.vmem %s1, 48
  %657 = vst.msk [vmem:[%s656] sm:$0xff] %vm655, %v654
  %s658 = scalar_lea.vmem %s0, 193
  %v659 = vld [vmem:[%s658] ss:$8 sm:$0xf]
  %s660 = scalar_lea.vmem %s0, 193
  %v661 = vld [vmem:[%s660] ss:$8 sm:$0xf0]
  %vm662 = vcmask 1047556
  %v663 = vsel %vm662, %v661, %v659
  %664 = vrot.lane.b32.xlu0 %v663, 8
  %v665 = vpop.permute.xlu0 %664
  %vm666 = vcmask 130112
  %s667 = scalar_lea.vmem %s1, 24
  %668 = vst.msk [vmem:[%s667] sm:$0xff] %vm666, %v665
  %s669 = scalar_lea.vmem %s0, 449
  %v670 = vld [vmem:[%s669] ss:$8 sm:$0xf]
  %s671 = scalar_lea.vmem %s0, 449
  %v672 = vld [vmem:[%s671] ss:$8 sm:$0xf0]
  %vm673 = vcmask 1047556
  %v674 = vsel %vm673, %v672, %v670
  %675 = vrot.lane.b32.xlu0 %v674, 8
  %v676 = vpop.permute.xlu0 %675
  %vm677 = vcmask 130112
  %s678 = scalar_lea.vmem %s1, 56
  %679 = vst.msk [vmem:[%s678] sm:$0xff] %vm677, %v676

// kernel: mul.18
$region0: #{mul.18}
  %s0 = inlined_call_operand.vmem [shape: f32[8,4,8,8], index: 0, kind: input, shape index: {}]
  %s1 = inlined_call_operand.vmem [shape: f32[32,64], index: 1, kind: output, shape index: {}]
  %v2 = vld [vmem:[%s0] ss:$8 sm:$0xf]
  %v3 = vld [vmem:[%s0] ss:$8 sm:$0xf0]
  %vm4 = vcmask 1047556
  %v5 = vsel %vm4, %v3, %v2
  %vm6 = vcmask 64512
  %7 = vst.msk [vmem:[%s1] sm:$0xff] %vm6, %v5
  %s8 = scalar_lea.vmem %s0, 64
  %v9 = vld [vmem:[%s8] ss:$8 sm:$0xf]
  %s10 = scalar_lea.vmem %s0, 64
  %v11 = vld [vmem:[%s10] ss:$8 sm:$0xf0]
  %vm12 = vcmask 1047556
  %v13 = vsel %vm12, %v11, %v9
  %vm14 = vcmask 64512
  %s15 = scalar_lea.vmem %s1, 8
  %16 = vst.msk [vmem:[%s15] sm:$0xff] %vm14, %v13
  %s17 = scalar_lea.vmem %s0, 128
  %v18 = vld [vmem:[%s17] ss:$8 sm:$0xf]
  %s19 = scalar_lea.vmem %s0, 128
  %v20 = vld [vmem:[%s19] ss:$8 sm:$0xf0]
  %vm21 = vcmask 1047556
  %v22 = vsel %vm21, %v20, %v18
  %vm23 = vcmask 64512
  %s24 = scalar_lea.vmem %s1, 16
  %25 = vst.msk [vmem:[%s24] sm:$0xff] %vm23, %v22
  %s26 = scalar_lea.vmem %s0, 192
  %v27 = vld [vmem:[%s26] ss:$8 sm:$0xf]
  %s28 = scalar_lea.vmem %s0, 192
  %v29 = vld [vmem:[%s28] ss:$8 sm:$0xf0]
  %vm30 = vcmask 1047556
  %v31 = vsel %vm30, %v29, %v27
  %vm32 = vcmask 64512
  %s33 = scalar_lea.vmem %s1, 24
  %34 = vst.msk [vmem:[%s33] sm:$0xff] %vm32, %v31
  %s35 = scalar_lea.vmem %s0, 7
  %v36 = vld [vmem:[%s35] ss:$8 sm:$0xf]
  %s37 = scalar_lea.vmem %s0, 7
  %v38 = vld [vmem:[%s37] ss:$8 sm:$0xf0]
  %vm39 = vcmask 1047556
  %v40 = vsel %vm39, %v38, %v36
  %41 = vrot.lane.b32.xlu0 %v40, 56
  %v42 = vpop.permute.xlu0 %41
  %vm43 = vcmask 523712
  %44 = vst.msk [vmem:[%s1] sm:$0xff] %vm43, %v42
  %s45 = scalar_lea.vmem %s0, 71
  %v46 = vld [vmem:[%s45] ss:$8 sm:$0xf]
  %s47 = scalar_lea.vmem %s0, 71
  %v48 = vld [vmem:[%s47] ss:$8 sm:$0xf0]
  %vm49 = vcmask 1047556
  %v50 = vsel %vm49, %v48, %v46
  %51 = vrot.lane.b32.xlu0 %v50, 56
  %v52 = vpop.permute.xlu0 %51
  %vm53 = vcmask 523712
  %s54 = scalar_lea.vmem %s1, 8
  %55 = vst.msk [vmem:[%s54] sm:$0xff] %vm53, %v52
  %s56 = scalar_lea.vmem %s0, 135
  %v57 = vld [vmem:[%s56] ss:$8 sm:$0xf]
  %s58 = scalar_lea.vmem %s0, 135
  %v59 = vld [vmem:[%s58] ss:$8 sm:$0xf0]
  %vm60 = vcmask 1047556
  %v61 = vsel %vm60, %v59, %v57
  %62 = vrot.lane.b32.xlu0 %v61, 56
  %v63 = vpop.permute.xlu0 %62
  %vm64 = vcmask 523712
  %s65 = scalar_lea.vmem %s1, 16
  %66 = vst.msk [vmem:[%s65] sm:$0xff] %vm64, %v63
  %s67 = scalar_lea.vmem %s0, 199
  %v68 = vld [vmem:[%s67] ss:$8 sm:$0xf]
  %s69 = scalar_lea.vmem %s0, 199
  %v70 = vld [vmem:[%s69] ss:$8 sm:$0xf0]
  %vm71 = vcmask 1047556
  %v72 = vsel %vm71, %v70, %v68
  %73 = vrot.lane.b32.xlu0 %v72, 56
  %v74 = vpop.permute.xlu0 %73
  %vm75 = vcmask 523712
  %s76 = scalar_lea.vmem %s1, 24
  %77 = vst.msk [vmem:[%s76] sm:$0xff] %vm75, %v74
  %s78 = scalar_lea.vmem %s0, 6
  %v79 = vld [vmem:[%s78] ss:$8 sm:$0xf]
  %s80 = scalar_lea.vmem %s0, 6
  %v81 = vld [vmem:[%s80] ss:$8 sm:$0xf0]
  %vm82 = vcmask 1047556
  %v83 = vsel %vm82, %v81, %v79
  %84 = vrot.lane.b32.xlu0 %v83, 48
  %v85 = vpop.permute.xlu0 %84
  %vm86 = vcmask 458112
  %87 = vst.msk [vmem:[%s1] sm:$0xff] %vm86, %v85
  %s88 = scalar_lea.vmem %s0, 70
  %v89 = vld [vmem:[%s88] ss:$8 sm:$0xf]
  %s90 = scalar_lea.vmem %s0, 70
  %v91 = vld [vmem:[%s90] ss:$8 sm:$0xf0]
  %vm92 = vcmask 1047556
  %v93 = vsel %vm92, %v91, %v89
  %94 = vrot.lane.b32.xlu0 %v93, 48
  %v95 = vpop.permute.xlu0 %94
  %vm96 = vcmask 458112
  %s97 = scalar_lea.vmem %s1, 8
  %98 = vst.msk [vmem:[%s97] sm:$0xff] %vm96, %v95
  %s99 = scalar_lea.vmem %s0, 134
  %v100 = vld [vmem:[%s99] ss:$8 sm:$0xf]
  %s101 = scalar_lea.vmem %s0, 134
  %v102 = vld [vmem:[%s101] ss:$8 sm:$0xf0]
  %vm103 = vcmask 1047556
  %v104 = vsel %vm103, %v102, %v100
  %105 = vrot.lane.b32.xlu0 %v104, 48
  %v106 = vpop.permute.xlu0 %105
  %vm107 = vcmask 458112
  %s108 = scalar_lea.vmem %s1, 16
  %109 = vst.msk [vmem:[%s108] sm:$0xff] %vm107, %v106
  %s110 = scalar_lea.vmem %s0, 198
  %v111 = vld [vmem:[%s110] ss:$8 sm:$0xf]
  %s112 = scalar_lea.vmem %s0, 198
  %v113 = vld [vmem:[%s112] ss:$8 sm:$0xf0]
  %vm114 = vcmask 1047556
  %v115 = vsel %vm114, %v113, %v111
  %116 = vrot.lane.b32.xlu0 %v115, 48
  %v117 = vpop.permute.xlu0 %116
  %vm118 = vcmask 458112
  %s119 = scalar_lea.vmem %s1, 24
  %120 = vst.msk [vmem:[%s119] sm:$0xff] %vm118, %v117
  %s121 = scalar_lea.vmem %s0, 5
  %v122 = vld [vmem:[%s121] ss:$8 sm:$0xf]
  %s123 = scalar_lea.vmem %s0, 5
  %v124 = vld [vmem:[%s123] ss:$8 sm:$0xf0]
  %vm125 = vcmask 1047556
  %v126 = vsel %vm125, %v124, %v122
  %127 = vrot.lane.b32.xlu0 %v126, 40
  %v128 = vpop.permute.xlu0 %127
  %vm129 = vcmask 392512
  %130 = vst.msk [vmem:[%s1] sm:$0xff] %vm129, %v128
  %s131 = scalar_lea.vmem %s0, 69
  %v132 = vld [vmem:[%s131] ss:$8 sm:$0xf]
  %s133 = scalar_lea.vmem %s0, 69
  %v134 = vld [vmem:[%s133] ss:$8 sm:$0xf0]
  %vm135 = vcmask 1047556
  %v136 = vsel %vm135, %v134, %v132
  %137 = vrot.lane.b32.xlu0 %v136, 40
  %v138 = vpop.permute.xlu0 %137
  %vm139 = vcmask 392512
  %s140 = scalar_lea.vmem %s1, 8
  %141 = vst.msk [vmem:[%s140] sm:$0xff] %vm139, %v138
  %s142 = scalar_lea.vmem %s0, 133
  %v143 = vld [vmem:[%s142] ss:$8 sm:$0xf]
  %s144 = scalar_lea.vmem %s0, 133
  %v145 = vld [vmem:[%s144] ss:$8 sm:$0xf0]
  %vm146 = vcmask 1047556
  %v147 = vsel %vm146, %v145, %v143
  %148 = vrot.lane.b32.xlu0 %v147, 40
  %v149 = vpop.permute.xlu0 %148
  %vm150 = vcmask 392512
  %s151 = scalar_lea.vmem %s1, 16
  %152 = vst.msk [vmem:[%s151] sm:$0xff] %vm150, %v149
  %s153 = scalar_lea.vmem %s0, 197
  %v154 = vld [vmem:[%s153] ss:$8 sm:$0xf]
  %s155 = scalar_lea.vmem %s0, 197
  %v156 = vld [vmem:[%s155] ss:$8 sm:$0xf0]
  %vm157 = vcmask 1047556
  %v158 = vsel %vm157, %v156, %v154
  %159 = vrot.lane.b32.xlu0 %v158, 40
  %v160 = vpop.permute.xlu0 %159
  %vm161 = vcmask 392512
  %s162 = scalar_lea.vmem %s1, 24
  %163 = vst.msk [vmem:[%s162] sm:$0xff] %vm161, %v160
  %s164 = scalar_lea.vmem %s0, 4
  %v165 = vld [vmem:[%s164] ss:$8 sm:$0xf]
  %s166 = scalar_lea.vmem %s0, 4
  %v167 = vld [vmem:[%s166] ss:$8 sm:$0xf0]
  %vm168 = vcmask 1047556
  %v169 = vsel %vm168, %v167, %v165
  %170 = vrot.lane.b32.xlu0 %v169, 32
  %v171 = vpop.permute.xlu0 %170
  %vm172 = vcmask 326912
  %173 = vst.msk [vmem:[%s1] sm:$0xff] %vm172, %v171
  %s174 = scalar_lea.vmem %s0, 68
  %v175 = vld [vmem:[%s174] ss:$8 sm:$0xf]
  %s176 = scalar_lea.vmem %s0, 68
  %v177 = vld [vmem:[%s176] ss:$8 sm:$0xf0]
  %vm178 = vcmask 1047556
  %v179 = vsel %vm178, %v177, %v175
  %180 = vrot.lane.b32.xlu0 %v179, 32
  %v181 = vpop.permute.xlu0 %180
  %vm182 = vcmask 326912
  %s183 = scalar_lea.vmem %s1, 8
  %184 = vst.msk [vmem:[%s183] sm:$0xff] %vm182, %v181
  %s185 = scalar_lea.vmem %s0, 132
  %v186 = vld [vmem:[%s185] ss:$8 sm:$0xf]
  %s187 = scalar_lea.vmem %s0, 132
  %v188 = vld [vmem:[%s187] ss:$8 sm:$0xf0]
  %vm189 = vcmask 1047556
  %v190 = vsel %vm189, %v188, %v186
  %191 = vrot.lane.b32.xlu0 %v190, 32
  %v192 = vpop.permute.xlu0 %191
  %vm193 = vcmask 326912
  %s194 = scalar_lea.vmem %s1, 16
  %195 = vst.msk [vmem:[%s194] sm:$0xff] %vm193, %v192
  %s196 = scalar_lea.vmem %s0, 196
  %v197 = vld [vmem:[%s196] ss:$8 sm:$0xf]
  %s198 = scalar_lea.vmem %s0, 196
  %v199 = vld [vmem:[%s198] ss:$8 sm:$0xf0]
  %vm200 = vcmask 1047556
  %v201 = vsel %vm200, %v199, %v197
  %202 = vrot.lane.b32.xlu0 %v201, 32
  %v203 = vpop.permute.xlu0 %202
  %vm204 = vcmask 326912
  %s205 = scalar_lea.vmem %s1, 24
  %206 = vst.msk [vmem:[%s205] sm:$0xff] %vm204, %v203
  %s207 = scalar_lea.vmem %s0, 3
  %v208 = vld [vmem:[%s207] ss:$8 sm:$0xf]
  %s209 = scalar_lea.vmem %s0, 3
  %v210 = vld [vmem:[%s209] ss:$8 sm:$0xf0]
  %vm211 = vcmask 1047556
  %v212 = vsel %vm211, %v210, %v208
  %213 = vrot.lane.b32.xlu0 %v212, 24
  %v214 = vpop.permute.xlu0 %213
  %vm215 = vcmask 261312
  %216 = vst.msk [vmem:[%s1] sm:$0xff] %vm215, %v214
  %s217 = scalar_lea.vmem %s0, 67
  %v218 = vld [vmem:[%s217] ss:$8 sm:$0xf]
  %s219 = scalar_lea.vmem %s0, 67
  %v220 = vld [vmem:[%s219] ss:$8 sm:$0xf0]
  %vm221 = vcmask 1047556
  %v222 = vsel %vm221, %v220, %v218
  %223 = vrot.lane.b32.xlu0 %v222, 24
  %v224 = vpop.permute.xlu0 %223
  %vm225 = vcmask 261312
  %s226 = scalar_lea.vmem %s1, 8
  %227 = vst.msk [vmem:[%s226] sm:$0xff] %vm225, %v224
  %s228 = scalar_lea.vmem %s0, 131
  %v229 = vld [vmem:[%s228] ss:$8 sm:$0xf]
  %s230 = scalar_lea.vmem %s0, 131
  %v231 = vld [vmem:[%s230] ss:$8 sm:$0xf0]
  %vm232 = vcmask 1047556
  %v233 = vsel %vm232, %v231, %v229
  %234 = vrot.lane.b32.xlu0 %v233, 24
  %v235 = vpop.permute.xlu0 %234
  %vm236 = vcmask 261312
  %s237 = scalar_lea.vmem %s1, 16
  %238 = vst.msk [vmem:[%s237] sm:$0xff] %vm236, %v235
  %s239 = scalar_lea.vmem %s0, 195
  %v240 = vld [vmem:[%s239] ss:$8 sm:$0xf]
  %s241 = scalar_lea.vmem %s0, 195
  %v242 = vld [vmem:[%s241] ss:$8 sm:$0xf0]
  %vm243 = vcmask 1047556
  %v244 = vsel %vm243, %v242, %v240
  %245 = vrot.lane.b32.xlu0 %v244, 24
  %v246 = vpop.permute.xlu0 %245
  %vm247 = vcmask 261312
  %s248 = scalar_lea.vmem %s1, 24
  %249 = vst.msk [vmem:[%s248] sm:$0xff] %vm247, %v246
  %s250 = scalar_lea.vmem %s0, 2
  %v251 = vld [vmem:[%s250] ss:$8 sm:$0xf]
  %s252 = scalar_lea.vmem %s0, 2
  %v253 = vld [vmem:[%s252] ss:$8 sm:$0xf0]
  %vm254 = vcmask 1047556
  %v255 = vsel %vm254, %v253, %v251
  %256 = vrot.lane.b32.xlu0 %v255, 16
  %v257 = vpop.permute.xlu0 %256
  %vm258 = vcmask 195712
  %259 = vst.msk [vmem:[%s1] sm:$0xff] %vm258, %v257
  %s260 = scalar_lea.vmem %s0, 66
  %v261 = vld [vmem:[%s260] ss:$8 sm:$0xf]
  %s262 = scalar_lea.vmem %s0, 66
  %v263 = vld [vmem:[%s262] ss:$8 sm:$0xf0]
  %vm264 = vcmask 1047556
  %v265 = vsel %vm264, %v263, %v261
  %266 = vrot.lane.b32.xlu0 %v265, 16
  %v267 = vpop.permute.xlu0 %266
  %vm268 = vcmask 195712
  %s269 = scalar_lea.vmem %s1, 8
  %270 = vst.msk [vmem:[%s269] sm:$0xff] %vm268, %v267
  %s271 = scalar_lea.vmem %s0, 130
  %v272 = vld [vmem:[%s271] ss:$8 sm:$0xf]
  %s273 = scalar_lea.vmem %s0, 130
  %v274 = vld [vmem:[%s273] ss:$8 sm:$0xf0]
  %vm275 = vcmask 1047556
  %v276 = vsel %vm275, %v274, %v272
  %277 = vrot.lane.b32.xlu0 %v276, 16
  %v278 = vpop.permute.xlu0 %277
  %vm279 = vcmask 195712
  %s280 = scalar_lea.vmem %s1, 16
  %281 = vst.msk [vmem:[%s280] sm:$0xff] %vm279, %v278
  %s282 = scalar_lea.vmem %s0, 194
  %v283 = vld [vmem:[%s282] ss:$8 sm:$0xf]
  %s284 = scalar_lea.vmem %s0, 194
  %v285 = vld [vmem:[%s284] ss:$8 sm:$0xf0]
  %vm286 = vcmask 1047556
  %v287 = vsel %vm286, %v285, %v283
  %288 = vrot.lane.b32.xlu0 %v287, 16
  %v289 = vpop.permute.xlu0 %288
  %vm290 = vcmask 195712
  %s291 = scalar_lea.vmem %s1, 24
  %292 = vst.msk [vmem:[%s291] sm:$0xff] %vm290, %v289
  %s293 = scalar_lea.vmem %s0, 1
  %v294 = vld [vmem:[%s293] ss:$8 sm:$0xf]
  %s295 = scalar_lea.vmem %s0, 1
  %v296 = vld [vmem:[%s295] ss:$8 sm:$0xf0]
  %vm297 = vcmask 1047556
  %v298 = vsel %vm297, %v296, %v294
  %299 = vrot.lane.b32.xlu0 %v298, 8
  %v300 = vpop.permute.xlu0 %299
  %vm301 = vcmask 130112
  %302 = vst.msk [vmem:[%s1] sm:$0xff] %vm301, %v300
  %s303 = scalar_lea.vmem %s0, 65
  %v304 = vld [vmem:[%s303] ss:$8 sm:$0xf]
  %s305 = scalar_lea.vmem %s0, 65
  %v306 = vld [vmem:[%s305] ss:$8 sm:$0xf0]
  %vm307 = vcmask 1047556
  %v308 = vsel %vm307, %v306, %v304
  %309 = vrot.lane.b32.xlu0 %v308, 8
  %v310 = vpop.permute.xlu0 %309
  %vm311 = vcmask 130112
  %s312 = scalar_lea.vmem %s1, 8
  %313 = vst.msk [vmem:[%s312] sm:$0xff] %vm311, %v310
  %s314 = scalar_lea.vmem %s0, 129
  %v315 = vld [vmem:[%s314] ss:$8 sm:$0xf]
  %s316 = scalar_lea.vmem %s0, 129
  %v317 = vld [vmem:[%s316] ss:$8 sm:$0xf0]
  %vm318 = vcmask 1047556
  %v319 = vsel %vm318, %v317, %v315
  %320 = vrot.lane.b32.xlu0 %v319, 8
  %v321 = vpop.permute.xlu0 %320
  %vm322 = vcmask 130112
  %s323 = scalar_lea.vmem %s1, 16
  %324 = vst.msk [vmem:[%s323] sm:$0xff] %vm322, %v321
  %s325 = scalar_lea.vmem %s0, 193
  %v326 = vld [vmem:[%s325] ss:$8 sm:$0xf]
  %s327 = scalar_lea.vmem %s0, 193
  %v328 = vld [vmem:[%s327] ss:$8 sm:$0xf0]
  %vm329 = vcmask 1047556
  %v330 = vsel %vm329, %v328, %v326
  %331 = vrot.lane.b32.xlu0 %v330, 8
  %v332 = vpop.permute.xlu0 %331
  %vm333 = vcmask 130112
  %s334 = scalar_lea.vmem %s1, 24
  %335 = vst.msk [vmem:[%s334] sm:$0xff] %vm333, %v332

// kernel: tile.43
$region0: #{tile.43}
  #allocation0 [shape = 's32[1]{0}', space=sflag, size = 0x4, scoped, tag = 'scoped memory for tile.43']
  %s0 = inlined_call_operand.vmem [shape: f32[8], index: 0, kind: input, shape index: {}]
  %s1 = inlined_call_operand.vmem [shape: f32[16,8], index: 1, kind: output, shape index: {}]
  // Predicated region
  $region2: #{tile.43} parent=0 // pred_check
    _
  $region3: #{tile.43} parent=0 // pred_check_branch
    %3 = sbr.rel (0) target = $region5
  $region4: #{tile.43} parent=0 // pred_region
    _
  $region5: #{tile.43} parent=0 // pred_fallthru
    _
  %v4 = vld [vmem:[%s0] ss:$0 sm:$0xff]
  %5 = vst [vmem:[%s1] sm:$0xff] %v4
  %s6 = scalar_lea.vmem %s1, 8
  %7 = vst [vmem:[%s6] sm:$0xff] %v4

// kernel: tile.56
$region0: #{tile.56}
  %s0 = inlined_call_operand.vmem [shape: f32[16,8], index: 0, kind: input, shape index: {}]
  %s1 = inlined_call_operand.vmem [shape: f32[1,128], index: 1, kind: output, shape index: {}]
  $region1: #{tile.56} parent=0
    #allocation0 [shape = 'u8[4096]{0}', space=vmem, size = 0x1000, scoped, tag = 'scoped mem for output reshape']
    %v2 = vld [vmem:[%s0] sm:$0x1]
    %vm3 = vcmask 64512
    %4 = vst.msk [vmem:[#allocation0] sm:$0x1] %vm3, %v2
    %s5 = scalar_lea.vmem %s0, 15
    %v6 = vld [vmem:[%s5] sm:$0x1]
    %7 = vrot.lane.b32.xlu0 %v6, 120
    %v8 = vpop.permute.xlu0 %7
    %vm9 = vcmask 1048512
    %10 = vst.msk [vmem:[#allocation0] sm:$0x1] %vm9, %v8
    %s11 = scalar_lea.vmem %s0, 14
    %v12 = vld [vmem:[%s11] sm:$0x1]
    %13 = vrot.lane.b32.xlu0 %v12, 112
    %v14 = vpop.permute.xlu0 %13
    %vm15 = vcmask 982912
    %16 = vst.msk [vmem:[#allocation0] sm:$0x1] %vm15, %v14
    %s17 = scalar_lea.vmem %s0, 13
    %v18 = vld [vmem:[%s17] sm:$0x1]
    %19 = vrot.lane.b32.xlu0 %v18, 104
    %v20 = vpop.permute.xlu0 %19
    %vm21 = vcmask 917312
    %22 = vst.msk [vmem:[#allocation0] sm:$0x1] %vm21, %v20
    %s23 = scalar_lea.vmem %s0, 12
    %v24 = vld [vmem:[%s23] sm:$0x1]
    %25 = vrot.lane.b32.xlu0 %v24, 96
    %v26 = vpop.permute.xlu0 %25
    %vm27 = vcmask 851712
    %28 = vst.msk [vmem:[#allocation0] sm:$0x1] %vm27, %v26
    %s29 = scalar_lea.vmem %s0, 11
    %v30 = vld [vmem:[%s29] sm:$0x1]
    %31 = vrot.lane.b32.xlu0 %v30, 88
    %v32 = vpop.permute.xlu0 %31
    %vm33 = vcmask 786112
    %34 = vst.msk [vmem:[#allocation0] sm:$0x1] %vm33, %v32
    %s35 = scalar_lea.vmem %s0, 10
    %v36 = vld [vmem:[%s35] sm:$0x1]
    %37 = vrot.lane.b32.xlu0 %v36, 80
    %v38 = vpop.permute.xlu0 %37
    %vm39 = vcmask 720512
    %40 = vst.msk [vmem:[#allocation0] sm:$0x1] %vm39, %v38
    %s41 = scalar_lea.vmem %s0, 9
    %v42 = vld [vmem:[%s41] sm:$0x1]
    %43 = vrot.lane.b32.xlu0 %v42, 72
    %v44 = vpop.permute.xlu0 %43
    %vm45 = vcmask 654912
    %46 = vst.msk [vmem:[#allocation0] sm:$0x1] %vm45, %v44
    %s47 = scalar_lea.vmem %s0, 8
    %v48 = vld [vmem:[%s47] sm:$0x1]
    %49 = vrot.lane.b32.xlu0 %v48, 64
    %v50 = vpop.permute.xlu0 %49
    %vm51 = vcmask 589312
    %52 = vst.msk [vmem:[#allocation0] sm:$0x1] %vm51, %v50
    %s53 = scalar_lea.vmem %s0, 7
    %v54 = vld [vmem:[%s53] sm:$0x1]
    %55 = vrot.lane.b32.xlu0 %v54, 56
    %v56 = vpop.permute.xlu0 %55
    %vm57 = vcmask 523712
    %58 = vst.msk [vmem:[#allocation0] sm:$0x1] %vm57, %v56
    %s59 = scalar_lea.vmem %s0, 6
    %v60 = vld [vmem:[%s59] sm:$0x1]
    %61 = vrot.lane.b32.xlu0 %v60, 48
    %v62 = vpop.permute.xlu0 %61
    %vm63 = vcmask 458112
    %64 = vst.msk [vmem:[#allocation0] sm:$0x1] %vm63, %v62
    %s65 = scalar_lea.vmem %s0, 5
    %v66 = vld [vmem:[%s65] sm:$0x1]
    %67 = vrot.lane.b32.xlu0 %v66, 40
    %v68 = vpop.permute.xlu0 %67
    %vm69 = vcmask 392512
    %70 = vst.msk [vmem:[#allocation0] sm:$0x1] %vm69, %v68
    %s71 = scalar_lea.vmem %s0, 4
    %v72 = vld [vmem:[%s71] sm:$0x1]
    %73 = vrot.lane.b32.xlu0 %v72, 32
    %v74 = vpop.permute.xlu0 %73
    %vm75 = vcmask 326912
    %76 = vst.msk [vmem:[#allocation0] sm:$0x1] %vm75, %v74
    %s77 = scalar_lea.vmem %s0, 3
    %v78 = vld [vmem:[%s77] sm:$0x1]
    %79 = vrot.lane.b32.xlu0 %v78, 24
    %v80 = vpop.permute.xlu0 %79
    %vm81 = vcmask 261312
    %82 = vst.msk [vmem:[#allocation0] sm:$0x1] %vm81, %v80
    %s83 = scalar_lea.vmem %s0, 2
    %v84 = vld [vmem:[%s83] sm:$0x1]
    %85 = vrot.lane.b32.xlu0 %v84, 16
    %v86 = vpop.permute.xlu0 %85
    %vm87 = vcmask 195712
    %88 = vst.msk [vmem:[#allocation0] sm:$0x1] %vm87, %v86
    %s89 = scalar_lea.vmem %s0, 1
    %v90 = vld [vmem:[%s89] sm:$0x1]
    %91 = vrot.lane.b32.xlu0 %v90, 8
    %v92 = vpop.permute.xlu0 %91
    %vm93 = vcmask 130112
    %94 = vst.msk [vmem:[#allocation0] sm:$0x1] %vm93, %v92
    %s96 = ssub.s32 2, 1
    %v97 = vld [vmem:[#allocation0] sm:%s96]
    %s99 = ssub.s32 2, 1
    %100 = vst [vmem:[%s1] sm:%s99] %v97

// kernel: down_block_forward.1
$region0: #{down_block_forward.1}
  #allocation0 [shape = 'u32[]', space=smem, size = 0x4, offset = 0x4, fixed_abs, tag = 'smem constant byte address 0x4 - core index']
  #allocation1 [shape = 'u32[72,128]{1,0:T(1,128)}', space=vmem, size = 0x9000, scoped, tag = 'internal scratch']
  %s0 = inlined_call_operand.vmem [shape: f32[8,256], index: 0, kind: input, shape index: {}]
  %s1 = inlined_call_operand.vmem [shape: bf16[192,128], index: 1, kind: input, shape index: {}]
  %s2 = inlined_call_operand.vmem [shape: f32[4,128], index: 2, kind: input, shape index: {}]
  %s3 = inlined_call_operand.vmem [shape: bf16[384,128], index: 3, kind: input, shape index: {}]
  %s4 = inlined_call_operand.vmem [shape: f32[4,128], index: 4, kind: input, shape index: {}]
  %s5 = inlined_call_operand.vmem [shape: f32[8,128], index: 5, kind: output, shape index: {}]
  %s6 = sld [smem:[#allocation0]]
  $region30: #{down_block_forward.1} parent=0
    _
  %s8 = ssub.s32 1, %s6
  %s9 = scalar_select 0, %s8, %s6
  // Predicated region
  $region2: #{down_block_forward.1} parent=0 // pred_check
    _
  $region3: #{down_block_forward.1} parent=0 // pred_check_branch
    %11 = sbr.rel (0) target = $region5
  $region4: #{down_block_forward.1} parent=0 // pred_region
    _
  $region5: #{down_block_forward.1} parent=0 // pred_fallthru
    _
  // Predicated region
  $region6: #{down_block_forward.1} parent=0 // pred_check
    _
  $region7: #{down_block_forward.1} parent=0 // pred_check_branch
    %13 = sbr.rel (0) target = $region9
  $region8: #{down_block_forward.1} parent=0 // pred_region
    _
  $region9: #{down_block_forward.1} parent=0 // pred_fallthru
    _
  // Predicated region
  $region10: #{down_block_forward.1} parent=0 // pred_check
    _
  $region11: #{down_block_forward.1} parent=0 // pred_check_branch
    %15 = sbr.rel (0) target = $region13
  $region12: #{down_block_forward.1} parent=0 // pred_region
    _
  $region13: #{down_block_forward.1} parent=0 // pred_fallthru
    _
  // Predicated region
  $region14: #{down_block_forward.1} parent=0 // pred_check
    _
  $region15: #{down_block_forward.1} parent=0 // pred_check_branch
    %17 = sbr.rel (0) target = $region17
  $region16: #{down_block_forward.1} parent=0 // pred_region
    _
  $region17: #{down_block_forward.1} parent=0 // pred_fallthru
    _
  // Predicated region
  $region18: #{down_block_forward.1} parent=0 // pred_check
    _
  $region19: #{down_block_forward.1} parent=0 // pred_check_branch
    %19 = sbr.rel (0) target = $region21
  $region20: #{down_block_forward.1} parent=0 // pred_region
    _
  $region21: #{down_block_forward.1} parent=0 // pred_fallthru
    _
  %v20 = vld [vmem:[%s0] sm:$0xff]
  %v21 = vld [vmem:[%s0 + $0x8] sm:$0xff]
  %v22 = vmax.f32 %v20, %v21
  %24 = vrot.lane.b32.xlu0 %v22, 64
  %v25 = vpop.permute.xlu0 %24
  %v27 = vmax.f32 %v22, %v25
  %v29 = vrot.slane %v27, 7
  %vm31 = vcmask 1040384
  %v32 = vsel %vm31, 0.0, %v29
  %v33 = vrot.slane %v27, 1
  %vm35 = vcmask 1046528
  %v36 = vsel %vm35, %v33, 0.0
  %37 = vrot.lane.b32.xlu0 %v27, 64
  %v38 = vpop.permute.xlu0 %37
  %vm40 = vcmask 523264
  %v41 = vsel %vm40, %v32, %v38
  %v42 = vld [vmem:[%s1] sm:$0xf]
  %v43 = vld [vmem:[%s1 + $0x4] sm:$0xf]
  %v44 = vld [vmem:[%s1 + $0x8] sm:$0xf]
  %v45 = vld [vmem:[%s1 + $0xc] sm:$0xf]
  %v46 = vld [vmem:[%s1 + $0x10] sm:$0xf]
  %v47 = vld [vmem:[%s1 + $0x14] sm:$0xf]
  %v48 = vld [vmem:[%s1 + $0x18] sm:$0xf]
  %v49 = vld [vmem:[%s1 + $0x1c] sm:$0xf]
  %v50 = vld [vmem:[%s1 + $0x20] sm:$0xf]
  %v51 = vld [vmem:[%s1 + $0x24] sm:$0xf]
  %v52 = vld [vmem:[%s1 + $0x28] sm:$0xf]
  %v53 = vld [vmem:[%s1 + $0x2c] sm:$0xf]
  %v54 = vld [vmem:[%s1 + $0x30] sm:$0xf]
  %v55 = vld [vmem:[%s1 + $0x34] sm:$0xf]
  %v56 = vld [vmem:[%s1 + $0x38] sm:$0xf]
  %v57 = vld [vmem:[%s1 + $0x3c] sm:$0xf]
  %v58 = vld [vmem:[%s1 + $0x40] sm:$0xf]
  %v59 = vld [vmem:[%s1 + $0x44] sm:$0xf]
  %v60 = vld [vmem:[%s1 + $0x48] sm:$0xf]
  %v61 = vld [vmem:[%s1 + $0x4c] sm:$0xf]
  %v62 = vld [vmem:[%s1 + $0x50] sm:$0xf]
  %v63 = vld [vmem:[%s1 + $0x54] sm:$0xf]
  %v64 = vld [vmem:[%s1 + $0x58] sm:$0xf]
  %v65 = vld [vmem:[%s1 + $0x5c] sm:$0xf]
  %v66 = vunpack.c.l.bf16 %v42
  %v67 = vunpack.c.l.bf16 %v43
  %v68 = vunpack.c.l.bf16 %v44
  %v69 = vunpack.c.l.bf16 %v45
  %v70 = vunpack.c.l.bf16 %v46
  %v71 = vunpack.c.l.bf16 %v47
  %v72 = vunpack.c.l.bf16 %v48
  %v73 = vunpack.c.l.bf16 %v49
  %v74 = vunpack.c.l.bf16 %v50
  %v75 = vunpack.c.l.bf16 %v51
  %v76 = vunpack.c.l.bf16 %v52
  %v77 = vunpack.c.l.bf16 %v53
  %v78 = vunpack.c.l.bf16 %v54
  %v79 = vunpack.c.l.bf16 %v55
  %v80 = vunpack.c.l.bf16 %v56
  %v81 = vunpack.c.l.bf16 %v57
  %v82 = vunpack.c.l.bf16 %v58
  %v83 = vunpack.c.l.bf16 %v59
  %v84 = vunpack.c.l.bf16 %v60
  %v85 = vunpack.c.l.bf16 %v61
  %v86 = vunpack.c.l.bf16 %v62
  %v87 = vunpack.c.l.bf16 %v63
  %v88 = vunpack.c.l.bf16 %v64
  %v89 = vunpack.c.l.bf16 %v65
  %v90 = vld [vmem:[%s2] sm:$0xf]
  %v91 = vperm.slane %v90, 0
  %v93 = vsel %vm40, %v36, 0
  %95 = vmatpush.msra.mxu0 %v81
  %96 = vmatpush.msra.mxu0 %v80
  %97 = vmatpush.msra.mxu0 %v79
  %98 = vmatpush.msra.mxu0 %v78
  %99 = vmatpush.msra.mxu0 %v77
  %100 = vmatpush.msra.mxu0 %v76
  %101 = vmatpush.msra.mxu0 %v75
  %102 = vmatpush.msra.mxu0 %v74
  %103 = vmatpush.msra.mxu0 %v73
  %104 = vmatpush.msra.mxu0 %v72
  %105 = vmatpush.msra.mxu0 %v71
  %106 = vmatpush.msra.mxu0 %v70
  %107 = vmatpush.msra.mxu0 %v69
  %108 = vmatpush.msra.mxu0 %v68
  %109 = vmatpush.msra.mxu0 %v67
  %110 = vmatpush.msra.mxu0 %v66
  %111 = vmatmul.f32.gmra.mxu0 %v41
  %v112 = vpop.f32.mrf.mxu0
  %v113 = vadd.f32 %v91, %v112
  %114 = vdwg.mxu0
  %115 = vmatpush.msra.mxu0 0.0
  %116 = vmatpush.msra.mxu0 0.0
  %117 = vmatpush.msra.mxu0 0.0
  %118 = vmatpush.msra.mxu0 0.0
  %119 = vmatpush.msra.mxu0 0.0
  %120 = vmatpush.msra.mxu0 0.0
  %121 = vmatpush.msra.mxu0 0.0
  %122 = vmatpush.msra.mxu0 0.0
  %123 = vmatpush.msra.mxu0 %v89
  %124 = vmatpush.msra.mxu0 %v88
  %125 = vmatpush.msra.mxu0 %v87
  %126 = vmatpush.msra.mxu0 %v86
  %127 = vmatpush.msra.mxu0 %v85
  %128 = vmatpush.msra.mxu0 %v84
  %129 = vmatpush.msra.mxu0 %v83
  %130 = vmatpush.msra.mxu0 %v82
  %131 = vmatmul.f32.gmra.mxu0 %v93
  %v132 = vpop.f32.mrf.mxu0
  %v133 = vadd.f32 %v113, %v132
  %134 = vdwg.mxu0
  %135 = vrot.lane.b32.xlu0 %v133, 8
  %v136 = vpop.permute.xlu0 %135
  %v137 = vadd.f32 %v133, %v136
  %138 = vrot.lane.b32.xlu0 %v137, 16
  %v139 = vpop.permute.xlu0 %138
  %v140 = vadd.f32 %v137, %v139
  %141 = vrot.lane.b32.xlu0 %v140, 32
  %v142 = vpop.permute.xlu0 %141
  %v143 = vadd.f32 %v140, %v142
  %144 = vrot.lane.b32.xlu0 %v143, 64
  %v145 = vpop.permute.xlu0 %144
  %v146 = vadd.f32 %v143, %v145
  %v147 = vrot.slane %v146, 4
  %v148 = vadd.f32 %v146, %v147
  %v149 = vrot.slane %v148, 2
  %v150 = vadd.f32 %v148, %v149
  %v151 = vrot.slane %v150, 1
  %v152 = vadd.f32 %v150, %v151
  %v153 = vmul.f32 %v152, 0.0078125
  %v154 = vsub.f32 %v133, %v153
  %v155 = vmul.f32 %v154, %v154
  %156 = vrot.lane.b32.xlu0 %v155, 8
  %v157 = vpop.permute.xlu0 %156
  %v158 = vadd.f32 %v155, %v157
  %159 = vrot.lane.b32.xlu0 %v158, 16
  %v160 = vpop.permute.xlu0 %159
  %v161 = vadd.f32 %v158, %v160
  %162 = vrot.lane.b32.xlu0 %v161, 32
  %v163 = vpop.permute.xlu0 %162
  %v164 = vadd.f32 %v161, %v163
  %165 = vrot.lane.b32.xlu0 %v164, 64
  %v166 = vpop.permute.xlu0 %165
  %v167 = vadd.f32 %v164, %v166
  %v168 = vrot.slane %v167, 4
  %v169 = vadd.f32 %v167, %v168
  %v170 = vrot.slane %v169, 2
  %v171 = vadd.f32 %v169, %v170
  %v172 = vrot.slane %v171, 1
  %v173 = vadd.f32 %v171, %v172
  %v174 = vmul.f32 %v173, 0.0078125
  %v175 = vadd.f32 %v174, 1e-05
  %v176 = vrsqrt.pop %v175
  %v177 = vmul.f32 %v176, %v175
  %v178 = vmul.f32 %v177, %v176
  %v179 = vmul.f32 0.5, %v178
  %v180 = vsub.f32 1.5, %v179
  %v181 = vmul.f32 %v176, %v180
  %vm182 = vweird.f32 %v175
  %vm183 = vweird.f32 %v176
  %vm184 = vmor %vm182, %vm183
  %v185 = vsel %vm184, %v176, %v181
  %v186 = vmul.f32 %v90, %v185
  %v187 = vperm.slane %v186, 1
  %v188 = vmul.f32 %v154, %v187
  %v189 = vperm.slane %v90, 2
  %v190 = vadd.f32 %v188, %v189
  %vm191 = vcmp.ge.f32.partialorder %v190, 0.0
  %v192 = vperm.slane %v90, 3
  %v193 = vmul.f32 %v192, %v190
  %v194 = vsel %vm191, %v190, %v193
  %v196 = vrot.slane %v194, 7
  %v198 = vsel %vm31, 0.0, %v196
  %v199 = vrot.slane %v194, 1
  %v201 = vsel %vm35, %v199, 0.0
  %v202 = vld [vmem:[%s3] sm:$0xf]
  %v203 = vld [vmem:[%s3 + $0x4] sm:$0xf]
  %v204 = vld [vmem:[%s3 + $0x8] sm:$0xf]
  %v205 = vld [vmem:[%s3 + $0xc] sm:$0xf]
  %v206 = vld [vmem:[%s3 + $0x10] sm:$0xf]
  %v207 = vld [vmem:[%s3 + $0x14] sm:$0xf]
  %v208 = vld [vmem:[%s3 + $0x18] sm:$0xf]
  %v209 = vld [vmem:[%s3 + $0x1c] sm:$0xf]
  %v210 = vld [vmem:[%s3 + $0x20] sm:$0xf]
  %v211 = vld [vmem:[%s3 + $0x24] sm:$0xf]
  %v212 = vld [vmem:[%s3 + $0x28] sm:$0xf]
  %v213 = vld [vmem:[%s3 + $0x2c] sm:$0xf]
  %v214 = vld [vmem:[%s3 + $0x30] sm:$0xf]
  %v215 = vld [vmem:[%s3 + $0x34] sm:$0xf]
  %v216 = vld [vmem:[%s3 + $0x38] sm:$0xf]
  %v217 = vld [vmem:[%s3 + $0x3c] sm:$0xf]
  %v218 = vld [vmem:[%s3 + $0x40] sm:$0xf]
  %v219 = vld [vmem:[%s3 + $0x44] sm:$0xf]
  %v220 = vld [vmem:[%s3 + $0x48] sm:$0xf]
  %v221 = vld [vmem:[%s3 + $0x4c] sm:$0xf]
  %v222 = vld [vmem:[%s3 + $0x50] sm:$0xf]
  %v223 = vld [vmem:[%s3 + $0x54] sm:$0xf]
  %v224 = vld [vmem:[%s3 + $0x58] sm:$0xf]
  %v225 = vld [vmem:[%s3 + $0x5c] sm:$0xf]
  %v226 = vld [vmem:[%s3 + $0x60] sm:$0xf]
  %v227 = vld [vmem:[%s3 + $0x64] sm:$0xf]
  %v228 = vld [vmem:[%s3 + $0x68] sm:$0xf]
  %v229 = vld [vmem:[%s3 + $0x6c] sm:$0xf]
  %v230 = vld [vmem:[%s3 + $0x70] sm:$0xf]
  %v231 = vld [vmem:[%s3 + $0x74] sm:$0xf]
  %v232 = vld [vmem:[%s3 + $0x78] sm:$0xf]
  %v233 = vld [vmem:[%s3 + $0x7c] sm:$0xf]
  %v234 = vld [vmem:[%s3 + $0x80] sm:$0xf]
  %v235 = vld [vmem:[%s3 + $0x84] sm:$0xf]
  %v236 = vld [vmem:[%s3 + $0x88] sm:$0xf]
  %v237 = vld [vmem:[%s3 + $0x8c] sm:$0xf]
  %v238 = vld [vmem:[%s3 + $0x90] sm:$0xf]
  %v239 = vld [vmem:[%s3 + $0x94] sm:$0xf]
  %v240 = vld [vmem:[%s3 + $0x98] sm:$0xf]
  %v241 = vld [vmem:[%s3 + $0x9c] sm:$0xf]
  %v242 = vld [vmem:[%s3 + $0xa0] sm:$0xf]
  %v243 = vld [vmem:[%s3 + $0xa4] sm:$0xf]
  %v244 = vld [vmem:[%s3 + $0xa8] sm:$0xf]
  %v245 = vld [vmem:[%s3 + $0xac] sm:$0xf]
  %v246 = vld [vmem:[%s3 + $0xb0] sm:$0xf]
  %v247 = vld [vmem:[%s3 + $0xb4] sm:$0xf]
  %v248 = vld [vmem:[%s3 + $0xb8] sm:$0xf]
  %v249 = vld [vmem:[%s3 + $0xbc] sm:$0xf]
  %v250 = vunpack.c.l.bf16 %v202
  %v251 = vunpack.c.l.bf16 %v203
  %v252 = vunpack.c.l.bf16 %v204
  %v253 = vunpack.c.l.bf16 %v205
  %v254 = vunpack.c.l.bf16 %v206
  %v255 = vunpack.c.l.bf16 %v207
  %v256 = vunpack.c.l.bf16 %v208
  %v257 = vunpack.c.l.bf16 %v209
  %v258 = vunpack.c.l.bf16 %v210
  %v259 = vunpack.c.l.bf16 %v211
  %v260 = vunpack.c.l.bf16 %v212
  %v261 = vunpack.c.l.bf16 %v213
  %v262 = vunpack.c.l.bf16 %v214
  %v263 = vunpack.c.l.bf16 %v215
  %v264 = vunpack.c.l.bf16 %v216
  %v265 = vunpack.c.l.bf16 %v217
  %v266 = vunpack.c.l.bf16 %v218
  %v267 = vunpack.c.l.bf16 %v219
  %v268 = vunpack.c.l.bf16 %v220
  %v269 = vunpack.c.l.bf16 %v221
  %v270 = vunpack.c.l.bf16 %v222
  %v271 = vunpack.c.l.bf16 %v223
  %v272 = vunpack.c.l.bf16 %v224
  %v273 = vunpack.c.l.bf16 %v225
  %v274 = vunpack.c.l.bf16 %v226
  %v275 = vunpack.c.l.bf16 %v227
  %v276 = vunpack.c.l.bf16 %v228
  %v277 = vunpack.c.l.bf16 %v229
  %v278 = vunpack.c.l.bf16 %v230
  %v279 = vunpack.c.l.bf16 %v231
  %v280 = vunpack.c.l.bf16 %v232
  %v281 = vunpack.c.l.bf16 %v233
  %v282 = vunpack.c.l.bf16 %v234
  %v283 = vunpack.c.l.bf16 %v235
  %v284 = vunpack.c.l.bf16 %v236
  %v285 = vunpack.c.l.bf16 %v237
  %v286 = vunpack.c.l.bf16 %v238
  %v287 = vunpack.c.l.bf16 %v239
  %v288 = vunpack.c.l.bf16 %v240
  %v289 = vunpack.c.l.bf16 %v241
  %v290 = vunpack.c.l.bf16 %v242
  %v291 = vunpack.c.l.bf16 %v243
  %v292 = vunpack.c.l.bf16 %v244
  %v293 = vunpack.c.l.bf16 %v245
  %v294 = vunpack.c.l.bf16 %v246
  %v295 = vunpack.c.l.bf16 %v247
  %v296 = vunpack.c.l.bf16 %v248
  %v297 = vunpack.c.l.bf16 %v249
  %v298 = vld [vmem:[%s4] sm:$0xf]
  %v299 = vperm.slane %v298, 0
  %300 = vmatpush.msra.mxu0 %v265
  %301 = vmatpush.msra.mxu0 %v264
  %302 = vmatpush.msra.mxu0 %v263
  %303 = vmatpush.msra.mxu0 %v262
  %304 = vmatpush.msra.mxu0 %v261
  %305 = vmatpush.msra.mxu0 %v260
  %306 = vmatpush.msra.mxu0 %v259
  %307 = vmatpush.msra.mxu0 %v258
  %308 = vmatpush.msra.mxu0 %v257
  %309 = vmatpush.msra.mxu0 %v256
  %310 = vmatpush.msra.mxu0 %v255
  %311 = vmatpush.msra.mxu0 %v254
  %312 = vmatpush.msra.mxu0 %v253
  %313 = vmatpush.msra.mxu0 %v252
  %314 = vmatpush.msra.mxu0 %v251
  %315 = vmatpush.msra.mxu0 %v250
  %316 = vmatmul.f32.gmra.mxu0 %v198
  %v317 = vpop.f32.mrf.mxu0
  %v318 = vadd.f32 %v299, %v317
  %319 = vdwg.mxu0
  %320 = vmatpush.msra.mxu0 %v281
  %321 = vmatpush.msra.mxu0 %v280
  %322 = vmatpush.msra.mxu0 %v279
  %323 = vmatpush.msra.mxu0 %v278
  %324 = vmatpush.msra.mxu0 %v277
  %325 = vmatpush.msra.mxu0 %v276
  %326 = vmatpush.msra.mxu0 %v275
  %327 = vmatpush.msra.mxu0 %v274
  %328 = vmatpush.msra.mxu0 %v273
  %329 = vmatpush.msra.mxu0 %v272
  %330 = vmatpush.msra.mxu0 %v271
  %331 = vmatpush.msra.mxu0 %v270
  %332 = vmatpush.msra.mxu0 %v269
  %333 = vmatpush.msra.mxu0 %v268
  %334 = vmatpush.msra.mxu0 %v267
  %335 = vmatpush.msra.mxu0 %v266
  %336 = vmatmul.f32.gmra.mxu0 %v194
  %v337 = vpop.f32.mrf.mxu0
  %v338 = vadd.f32 %v318, %v337
  %339 = vdwg.mxu0
  %340 = vmatpush.msra.mxu0 %v297
  %341 = vmatpush.msra.mxu0 %v296
  %342 = vmatpush.msra.mxu0 %v295
  %343 = vmatpush.msra.mxu0 %v294
  %344 = vmatpush.msra.mxu0 %v293
  %345 = vmatpush.msra.mxu0 %v292
  %346 = vmatpush.msra.mxu0 %v291
  %347 = vmatpush.msra.mxu0 %v290
  %348 = vmatpush.msra.mxu0 %v289
  %349 = vmatpush.msra.mxu0 %v288
  %350 = vmatpush.msra.mxu0 %v287
  %351 = vmatpush.msra.mxu0 %v286
  %352 = vmatpush.msra.mxu0 %v285
  %353 = vmatpush.msra.mxu0 %v284
  %354 = vmatpush.msra.mxu0 %v283
  %355 = vmatpush.msra.mxu0 %v282
  %356 = vmatmul.f32.gmra.mxu0 %v201
  %v357 = vpop.f32.mrf.mxu0
  %v358 = vadd.f32 %v338, %v357
  %359 = vdwg.mxu0
  %360 = vrot.lane.b32.xlu0 %v358, 8
  %v361 = vpop.permute.xlu0 %360
  %v362 = vadd.f32 %v358, %v361
  %363 = vrot.lane.b32.xlu0 %v362, 16
  %v364 = vpop.permute.xlu0 %363
  %v365 = vadd.f32 %v362, %v364
  %366 = vrot.lane.b32.xlu0 %v365, 32
  %v367 = vpop.permute.xlu0 %366
  %v368 = vadd.f32 %v365, %v367
  %369 = vrot.lane.b32.xlu0 %v368, 64
  %v370 = vpop.permute.xlu0 %369
  %v371 = vadd.f32 %v368, %v370
  %v372 = vrot.slane %v371, 4
  %v373 = vadd.f32 %v371, %v372
  %v374 = vrot.slane %v373, 2
  %v375 = vadd.f32 %v373, %v374
  %v376 = vrot.slane %v375, 1
  %v377 = vadd.f32 %v375, %v376
  %v378 = vmul.f32 %v377, 0.0078125
  %v379 = vsub.f32 %v358, %v378
  %v380 = vmul.f32 %v379, %v379
  %381 = vrot.lane.b32.xlu0 %v380, 8
  %v382 = vpop.permute.xlu0 %381
  %v383 = vadd.f32 %v380, %v382
  %384 = vrot.lane.b32.xlu0 %v383, 16
  %v385 = vpop.permute.xlu0 %384
  %v386 = vadd.f32 %v383, %v385
  %387 = vrot.lane.b32.xlu0 %v386, 32
  %v388 = vpop.permute.xlu0 %387
  %v389 = vadd.f32 %v386, %v388
  %390 = vrot.lane.b32.xlu0 %v389, 64
  %v391 = vpop.permute.xlu0 %390
  %v392 = vadd.f32 %v389, %v391
  %v393 = vrot.slane %v392, 4
  %v394 = vadd.f32 %v392, %v393
  %v395 = vrot.slane %v394, 2
  %v396 = vadd.f32 %v394, %v395
  %v397 = vrot.slane %v396, 1
  %v398 = vadd.f32 %v396, %v397
  %v399 = vmul.f32 %v398, 0.0078125
  %v400 = vadd.f32 %v399, 1e-05
  %v401 = vrsqrt.pop %v400
  %v402 = vmul.f32 %v401, %v400
  %v403 = vmul.f32 %v402, %v401
  %v404 = vmul.f32 0.5, %v403
  %v405 = vsub.f32 1.5, %v404
  %v406 = vmul.f32 %v401, %v405
  %vm407 = vweird.f32 %v400
  %vm408 = vweird.f32 %v401
  %vm409 = vmor %vm407, %vm408
  %v410 = vsel %vm409, %v401, %v406
  %v411 = vmul.f32 %v298, %v410
  %v412 = vperm.slane %v411, 1
  %v413 = vmul.f32 %v379, %v412
  %v414 = vperm.slane %v298, 2
  %v415 = vadd.f32 %v413, %v414
  %vm416 = vcmp.ge.f32.partialorder %v415, 0.0
  %v417 = vperm.slane %v298, 3
  %v418 = vmul.f32 %v417, %v415
  %v419 = vsel %vm416, %v415, %v418
  %420 = vst [vmem:[%s5] sm:$0xff] %v419
  // Predicated region
  $region22: #{down_block_forward.1} parent=0 // pred_check
    _
  $region23: #{down_block_forward.1} parent=0 // pred_check_branch
    %422 = sbr.rel (0) target = $region25
  $region24: #{down_block_forward.1} parent=0 // pred_region
    _
  $region25: #{down_block_forward.1} parent=0 // pred_fallthru
    _
  // Predicated region
  $region26: #{down_block_forward.1} parent=0 // pred_check
    _
  $region27: #{down_block_forward.1} parent=0 // pred_check_branch
    %424 = sbr.rel (0) target = $region29
  $region28: #{down_block_forward.1} parent=0 // pred_region
    _
  $region29: #{down_block_forward.1} parent=0 // pred_fallthru
    _

</llo_original>
